<compile_context>
chip_gen: v7x
topology: tpu7x:2x2x1
jax: 0.10.0
libtpu: 0.0.40
codegen_flags: <defaults>
</compile_context>

<pallas_src>
import functools

import jax
import jax.numpy as jnp
from jax.experimental import pallas as pl
from jax.experimental.pallas import tpu as pltpu


NEG_BIG = -1.0e30  # "minus infinity" for padded logits (finite -> no NaN risk)


def fnn_kernel(x_ref, w1_ref, b1_ref, w2_ref, b2_ref, o_ref, m_sc, l_sc, acc_sc):
    # x_ref:   (tm, d_model)   bf16, resident across the hidden axis
    # w1_ref:  (d_model, th)   bf16 chunk of W1^T (streamed)
    # b1_ref:  (1, th)         f32 chunk of b1 (padded entries = NEG_BIG)
    # w2_ref:  (th, d_model)   bf16 chunk of W2^T (streamed)
    # b2_ref:  (1, d_model)    f32
    # o_ref:   (tm, d_model)
    # m_sc/l_sc: (tm, 1) f32   acc_sc: (tm, d_model) f32
    k = pl.program_id(1)

    @pl.when(k == 0)
    def _init():
        m_sc[...] = jnp.full_like(m_sc, -jnp.inf)
        l_sc[...] = jnp.zeros_like(l_sc)
        acc_sc[...] = jnp.zeros_like(acc_sc)

    # Logits chunk (tm, th): bf16 MXU matmul, f32 accumulate, f32 bias add.
    # Padded hidden columns come out as ~-1e30 (zero W1 cols + NEG_BIG bias),
    # so no iota/where masking is needed.
    h = jnp.dot(x_ref[...], w1_ref[...],
                preferred_element_type=jnp.float32) + b1_ref[...]

    # Online softmax update.
    m_prev = m_sc[...]
    m_new = jnp.maximum(m_prev, jnp.max(h, axis=-1, keepdims=True))
    scale = jnp.exp(m_prev - m_new)                 # (tm, 1) f32; 0 at k == 0
    # bf16 exp: ~2x EUP throughput on v6e/v7x, and feeds the MXU directly.
    e = jnp.exp((h - m_new).astype(jnp.bfloat16))   # padded cols -> 0

    l_sc[...] = scale * l_sc[...] + jnp.sum(
        e, axis=-1, keepdims=True, dtype=jnp.float32)
    acc_sc[...] = scale * acc_sc[...] + jnp.dot(
        e, w2_ref[...], preferred_element_type=jnp.float32)
    m_sc[...] = m_new

    @pl.when(k == pl.num_programs(1) - 1)
    def _finalize():
        # Exact divide: runs once per row tile, so approx reciprocal buys nothing.
        o_ref[...] = (acc_sc[...] / l_sc[...] + b2_ref[...]).astype(o_ref.dtype)


def pick_hidden_tile(hidden, max_th=4096):
    """Largest th (multiple of 128, <= max_th) dividing the minimally padded hidden.

    hidden=50000 -> pad to 50048 = 128*17*23 -> th=2944 (17 chunks, 48 pad cols).
    """
    n128 = pl.cdiv(hidden, 128)
    best = 1
    for d in range(1, n128 + 1):
        if n128 % d == 0 and d * 128 <= max_th:
            best = d
    return best * 128


def prepare_fnn_params(w1_t, b1, w2_t, b2, *, th):
    """Pad the hidden dim to a multiple of th and pre-cast weights to bf16.

    Call ONCE and reuse the result: at target size this is a full read/cast pass
    over ~50 MB of weights and must stay out of the per-call path.
    w1_t: (d_model, hidden), b1: (hidden,), w2_t: (hidden, d_model), b2: (d_model,).
    """
    d_model, hidden = w1_t.shape
    h_pad = pl.cdiv(hidden, th) * th
    pad = h_pad - hidden
    if pad:
        w1_t = jnp.pad(w1_t, ((0, 0), (0, pad)))
        # Padded logits = x @ 0 + NEG_BIG -> exp(...) == 0 inside the kernel.
        b1 = jnp.pad(b1, (0, pad), constant_values=NEG_BIG)
        w2_t = jnp.pad(w2_t, ((0, pad), (0, 0)))
    w1_bf = w1_t.astype(jnp.bfloat16)
    w2_bf = w2_t.astype(jnp.bfloat16)
    b1_2d = b1.reshape(1, h_pad).astype(jnp.float32)
    b2_2d = b2.reshape(1, d_model).astype(jnp.float32)
    return w1_bf, b1_2d, w2_bf, b2_2d


@functools.partial(jax.jit, static_argnames=("tm", "th"))
def fnn_forward(x, w1_bf, b1_2d, w2_bf, b2_2d, *, tm=512, th=None):
    """x: (batch, seq, d_model); weights already padded/cast by prepare_fnn_params."""
    batch, seq, d_model = x.shape
    h_pad = w1_bf.shape[1]
    if th is None:
        th = h_pad
    assert h_pad % th == 0, "hidden padding must be a multiple of th"

    M = batch * seq
    # bf16 x: resident over the reduction axis, no per-chunk cast, half the DMA.
    x2 = x.reshape(M, d_model).astype(jnp.bfloat16)

    # Pad rows to a multiple of tm (extra zero rows are computed and discarded).
    m_pad = pl.cdiv(M, tm) * tm
    if m_pad != M:
        x2 = jnp.pad(x2, ((0, m_pad - M), (0, 0)))

    # VMEM budget for this tiling: double-buffered bf16 W1/W2 chunks + x/out
    # blocks + f32 scratch + the (tm, th) f32 h/e compiler temporaries.
    # Defaults (tm=512, th=2944, d_model=512) come to ~45 MiB -> fits v7x 64 MiB.
    out_itemsize = jnp.dtype(x.dtype).itemsize
    vmem_est = (
        2 * 2 * (d_model * th * 2)          # W1 + W2 chunks, bf16, double-buffered
        + 2 * tm * d_model * 2              # x block, bf16, double-buffered
        + 2 * tm * d_model * out_itemsize   # out block, double-buffered
        + tm * d_model * 4 + 2 * tm * 4     # acc + m + l scratch
        + 3 * tm * th * 4                   # h / e / intermediate f32 temporaries
    )
    vmem_limit = max(int(vmem_est * 1.5), 32 * 1024 * 1024)

    out2 = pl.pallas_call(
        fnn_kernel,
        out_shape=jax.ShapeDtypeStruct((m_pad, d_model), x.dtype),
        grid_spec=pltpu.PrefetchScalarGridSpec(
            num_scalar_prefetch=0,
            grid=(m_pad // tm, h_pad // th),            # hidden reduction axis last
            in_specs=[
                pl.BlockSpec((tm, d_model), lambda i, k: (i, 0)),   # x (resident over k)
                pl.BlockSpec((d_model, th), lambda i, k: (0, k)),   # W1^T chunk (streamed)
                pl.BlockSpec((1, th), lambda i, k: (0, k)),         # b1 chunk
                pl.BlockSpec((th, d_model), lambda i, k: (k, 0)),   # W2^T chunk (streamed)
                pl.BlockSpec((1, d_model), lambda i, k: (0, 0)),    # b2
            ],
            out_specs=pl.BlockSpec((tm, d_model), lambda i, k: (i, 0)),
            scratch_shapes=[
                pltpu.VMEM((tm, 1), jnp.float32),        # running max
                pltpu.VMEM((tm, 1), jnp.float32),        # running sum
                pltpu.VMEM((tm, d_model), jnp.float32),  # running acc = sum p@W2
            ],
        ),
        compiler_params=pltpu.CompilerParams(
            dimension_semantics=("parallel", "arbitrary"),
            vmem_limit_bytes=vmem_limit,
        ),
    )(x2, w1_bf, b1_2d, w2_bf, b2_2d)

    return out2[:M].reshape(batch, seq, d_model)


def init_linear(key, in_features, out_features, dtype=jnp.float32):
    """PyTorch nn.Linear default init: U(-1/sqrt(in), 1/sqrt(in)) for W and b."""
    kw, kb = jax.random.split(key)
    bound = 1.0 / jnp.sqrt(jnp.array(in_features, dtype))
    w = jax.random.uniform(kw, (out_features, in_features), dtype, -bound, bound)
    b = jax.random.uniform(kb, (out_features,), dtype, -bound, bound)
    return w, b


if __name__ == "__main__":
    # Small shapes consistent with the module's forward (feature-last input).
    # hidden deliberately not a multiple of 128, and th forced small (th=128) so
    # the multi-chunk online-softmax + padded-bias masking path is exercised;
    # at the real size pick_hidden_tile(50000) would return 2944.
    batch, seq = 2, 8
    d_model, hidden = 128, 600

    key = jax.random.PRNGKey(0)
    kx, k1, k3 = jax.random.split(key, 3)

    x = jax.random.normal(kx, (batch, seq, d_model), jnp.float32)
    w1, b1 = init_linear(k1, d_model, hidden)   # l1: (hidden, d_model), (hidden,)
    w2, b2 = init_linear(k3, hidden, d_model)   # l3: (d_model, hidden), (d_model,)

    th = 128                                    # pick_hidden_tile(hidden) -> 640
    # One-time weight pad + bf16 cast (kept out of the per-call path).
    params = prepare_fnn_params(w1.T, b1, w2.T, b2, th=th)

    out = fnn_forward(x, *params, tm=128, th=th)
    out = jax.block_until_ready(out)

    # Reference mirroring the kernel's mixed precision (bf16 matmuls, f32 softmax).
    h_ref = jnp.dot(x.astype(jnp.bfloat16), w1.T.astype(jnp.bfloat16),
                    preferred_element_type=jnp.float32) + b1
    p_ref = jax.nn.softmax(h_ref, axis=-1)
    y_ref = jnp.dot(p_ref.astype(jnp.bfloat16), w2.T.astype(jnp.bfloat16),
                    preferred_element_type=jnp.float32) + b2

    assert out.shape == (batch, seq, d_model)
    assert jnp.allclose(out, y_ref, atol=1e-2, rtol=1e-2), "mismatch vs JAX reference"

    print("KERNEL_OK")
</pallas_src>

<mosaic_0001>
module attributes {stable_mosaic.version = 11 : i64} {
  func.func @fnn_kernel(%arg0: i32, %arg1: i32, %arg2: memref<128x128xbf16, #tpu.memory_space<vmem>>, %arg3: memref<128x128xbf16, #tpu.memory_space<vmem>>, %arg4: memref<1x128xf32, #tpu.memory_space<vmem>>, %arg5: memref<128x128xbf16, #tpu.memory_space<vmem>>, %arg6: memref<1x128xf32, #tpu.memory_space<vmem>>, %arg7: memref<128x128xf32, #tpu.memory_space<vmem>>, %arg8: memref<128x1xf32, #tpu.memory_space<vmem>>, %arg9: memref<128x1xf32, #tpu.memory_space<vmem>>, %arg10: memref<128x128xf32, #tpu.memory_space<vmem>>) attributes {dimension_semantics = [#tpu.dimension_semantics<parallel>, #tpu.dimension_semantics<arbitrary>], iteration_bounds = array<i64: 1, 5>, scalar_prefetch = 0 : i64, scratch_operands = 3 : i64, tpu.core_type = #tpu.core_type<tc>, window_params = [{transform_indices = @transform_0, window_bounds = array<i64: 128, 128>}, {transform_indices = @transform_1, window_bounds = array<i64: 128, 128>}, {transform_indices = @transform_2, window_bounds = array<i64: 1, 128>}, {transform_indices = @transform_3, window_bounds = array<i64: 128, 128>}, {pipeline_mode = #tpu.pipeline_mode<synchronous>, transform_indices = @transform_4, window_bounds = array<i64: 1, 128>}, {transform_indices = @transform_5, window_bounds = array<i64: 128, 128>}]} {
    %c0_i32 = arith.constant 0 : i32
    %0 = arith.cmpi eq, %arg1, %c0_i32 : i32
    %1 = arith.extui %0 : i1 to i32
    %c0_i32_0 = arith.constant 0 : i32
    %2 = arith.cmpi ne, %1, %c0_i32_0 : i32
    scf.if %2 {
      %cst_24 = arith.constant 0xFF800000 : f32
      %37 = vector.broadcast %cst_24 : f32 to vector<128x1xf32>
      %c0_25 = arith.constant 0 : index
      %c0_26 = arith.constant 0 : index
      %38 = vector.load %arg8[%c0_25, %c0_26] : memref<128x1xf32, #tpu.memory_space<vmem>>, vector<128x1xf32>
      tpu.vector_store %arg8[%c0_25, %c0_26], %37 {strides = array<i32>} : memref<128x1xf32, #tpu.memory_space<vmem>>, vector<128x1xf32>,
      %cst_27 = arith.constant 0.000000e+00 : f32
      %39 = vector.broadcast %cst_27 : f32 to vector<128x1xf32>
      %c0_28 = arith.constant 0 : index
      %c0_29 = arith.constant 0 : index
      %40 = vector.load %arg9[%c0_28, %c0_29] : memref<128x1xf32, #tpu.memory_space<vmem>>, vector<128x1xf32>
      tpu.vector_store %arg9[%c0_28, %c0_29], %39 {strides = array<i32>} : memref<128x1xf32, #tpu.memory_space<vmem>>, vector<128x1xf32>,
      %cst_30 = arith.constant 0.000000e+00 : f32
      %41 = vector.broadcast %cst_30 : f32 to vector<128x128xf32>
      %c0_31 = arith.constant 0 : index
      %c0_32 = arith.constant 0 : index
      %42 = vector.load %arg10[%c0_31, %c0_32] : memref<128x128xf32, #tpu.memory_space<vmem>>, vector<128x128xf32>
      tpu.vector_store %arg10[%c0_31, %c0_32], %41 {strides = array<i32>} : memref<128x128xf32, #tpu.memory_space<vmem>>, vector<128x128xf32>,
    } else {
    }
    %c0 = arith.constant 0 : index
    %c0_1 = arith.constant 0 : index
    %3 = vector.load %arg2[%c0, %c0_1] : memref<128x128xbf16, #tpu.memory_space<vmem>>, vector<128x128xbf16>
    %c0_2 = arith.constant 0 : index
    %c0_3 = arith.constant 0 : index
    %4 = vector.load %arg3[%c0_2, %c0_3] : memref<128x128xbf16, #tpu.memory_space<vmem>>, vector<128x128xbf16>
    %cst = arith.constant dense<0.000000e+00> : vector<128x128xf32>
    %5 = tpu.matmul %3, %4, %cst {dimension_numbers = #tpu.dot_dimension_numbers<[1], [0], [0], [1], [0, 0, 1, 1], [], []>} : vector<128x128xbf16>, vector<128x128xbf16>, vector<128x128xf32> -> vector<128x128xf32>
    %c0_4 = arith.constant 0 : index
    %c0_5 = arith.constant 0 : index
    %6 = vector.load %arg4[%c0_4, %c0_5] : memref<1x128xf32, #tpu.memory_space<vmem>>, vector<1x128xf32>
    %7 = vector.broadcast %6 : vector<1x128xf32> to vector<128x128xf32>
    %8 = arith.addf %5, %7 : vector<128x128xf32>
    %c0_6 = arith.constant 0 : index
    %c0_7 = arith.constant 0 : index
    %9 = vector.load %arg8[%c0_6, %c0_7] : memref<128x1xf32, #tpu.memory_space<vmem>>, vector<128x1xf32>
    %cst_8 = arith.constant dense<0xFF800000> : vector<128xf32>
    %10 = vector.multi_reduction <maximumf>, %8, %cst_8 [1] : vector<128x128xf32> to vector<128xf32>
    %11 = vector.shape_cast %10 : vector<128xf32> to vector<128x1xf32>
    %12 = arith.maximumf %9, %11 : vector<128x1xf32>
    %13 = arith.subf %9, %12 : vector<128x1xf32>
    %14 = math.exp %13 : vector<128x1xf32>
    %15 = vector.broadcast %12 : vector<128x1xf32> to vector<128x128xf32>
    %16 = arith.subf %8, %15 : vector<128x128xf32>
    %17 = arith.truncf %16 : vector<128x128xf32> to vector<128x128xbf16>
    %18 = math.exp %17 : vector<128x128xbf16>
    %c0_9 = arith.constant 0 : index
    %c0_10 = arith.constant 0 : index
    %19 = vector.load %arg9[%c0_9, %c0_10] : memref<128x1xf32, #tpu.memory_space<vmem>>, vector<128x1xf32>
    %20 = arith.mulf %14, %19 : vector<128x1xf32>
    %21 = arith.extf %18 : vector<128x128xbf16> to vector<128x128xf32>
    %cst_11 = arith.constant dense<0.000000e+00> : vector<128xf32>
    %22 = vector.multi_reduction <add>, %21, %cst_11 [1] : vector<128x128xf32> to vector<128xf32>
    %23 = vector.shape_cast %22 : vector<128xf32> to vector<128x1xf32>
    %24 = arith.addf %20, %23 : vector<128x1xf32>
    %c0_12 = arith.constant 0 : index
    %c0_13 = arith.constant 0 : index
    %25 = vector.load %arg9[%c0_12, %c0_13] : memref<128x1xf32, #tpu.memory_space<vmem>>, vector<128x1xf32>
    tpu.vector_store %arg9[%c0_12, %c0_13], %24 {strides = array<i32>} : memref<128x1xf32, #tpu.memory_space<vmem>>, vector<128x1xf32>,
    %c0_14 = arith.constant 0 : index
    %c0_15 = arith.constant 0 : index
    %26 = vector.load %arg10[%c0_14, %c0_15] : memref<128x128xf32, #tpu.memory_space<vmem>>, vector<128x128xf32>
    %27 = vector.broadcast %14 : vector<128x1xf32> to vector<128x128xf32>
    %28 = arith.mulf %27, %26 : vector<128x128xf32>
    %c0_16 = arith.constant 0 : index
    %c0_17 = arith.constant 0 : index
    %29 = vector.load %arg5[%c0_16, %c0_17] : memref<128x128xbf16, #tpu.memory_space<vmem>>, vector<128x128xbf16>
    %cst_18 = arith.constant dense<0.000000e+00> : vector<128x128xf32>
    %30 = tpu.matmul %18, %29, %cst_18 {dimension_numbers = #tpu.dot_dimension_numbers<[1], [0], [0], [1], [0, 0, 1, 1], [], []>} : vector<128x128xbf16>, vector<128x128xbf16>, vector<128x128xf32> -> vector<128x128xf32>
    %31 = arith.addf %28, %30 : vector<128x128xf32>
    %c0_19 = arith.constant 0 : index
    %c0_20 = arith.constant 0 : index
    %32 = vector.load %arg10[%c0_19, %c0_20] : memref<128x128xf32, #tpu.memory_space<vmem>>, vector<128x128xf32>
    tpu.vector_store %arg10[%c0_19, %c0_20], %31 {strides = array<i32>} : memref<128x128xf32, #tpu.memory_space<vmem>>, vector<128x128xf32>,
    %c0_21 = arith.constant 0 : index
    %c0_22 = arith.constant 0 : index
    %33 = vector.load %arg8[%c0_21, %c0_22] : memref<128x1xf32, #tpu.memory_space<vmem>>, vector<128x1xf32>
    tpu.vector_store %arg8[%c0_21, %c0_22], %12 {strides = array<i32>} : memref<128x1xf32, #tpu.memory_space<vmem>>, vector<128x1xf32>,
    %c4_i32 = arith.constant 4 : i32
    %34 = arith.cmpi eq, %arg1, %c4_i32 : i32
    %35 = arith.extui %34 : i1 to i32
    %c0_i32_23 = arith.constant 0 : i32
    %36 = arith.cmpi ne, %35, %c0_i32_23 : i32
    scf.if %36 {
      %c0_24 = arith.constant 0 : index
      %c0_25 = arith.constant 0 : index
      %37 = vector.load %arg10[%c0_24, %c0_25] : memref<128x128xf32, #tpu.memory_space<vmem>>, vector<128x128xf32>
      %c0_26 = arith.constant 0 : index
      %c0_27 = arith.constant 0 : index
      %38 = vector.load %arg9[%c0_26, %c0_27] : memref<128x1xf32, #tpu.memory_space<vmem>>, vector<128x1xf32>
      %39 = vector.broadcast %38 : vector<128x1xf32> to vector<128x128xf32>
      %40 = arith.divf %37, %39 : vector<128x128xf32>
      %c0_28 = arith.constant 0 : index
      %c0_29 = arith.constant 0 : index
      %41 = vector.load %arg6[%c0_28, %c0_29] : memref<1x128xf32, #tpu.memory_space<vmem>>, vector<1x128xf32>
      %42 = vector.broadcast %41 : vector<1x128xf32> to vector<128x128xf32>
      %43 = arith.addf %40, %42 : vector<128x128xf32>
      %c0_30 = arith.constant 0 : index
      %c0_31 = arith.constant 0 : index
      %44 = vector.load %arg7[%c0_30, %c0_31] : memref<128x128xf32, #tpu.memory_space<vmem>>, vector<128x128xf32>
      tpu.vector_store %arg7[%c0_30, %c0_31], %43 {strides = array<i32>} : memref<128x128xf32, #tpu.memory_space<vmem>>, vector<128x128xf32>,
    } else {
    }
    return
  }
  func.func @transform_0(%arg0: i32, %arg1: i32) -> (i32, i32) {
    %c0_i32 = arith.constant 0 : i32
    %c0_i32_0 = arith.constant 0 : i32
    return %arg0, %c0_i32 : i32, i32
  }
  func.func @transform_1(%arg0: i32, %arg1: i32) -> (i32, i32) {
    %c0_i32 = arith.constant 0 : i32
    %c0_i32_0 = arith.constant 0 : i32
    return %c0_i32, %arg1 : i32, i32
  }
  func.func @transform_2(%arg0: i32, %arg1: i32) -> (i32, i32) {
    %c0_i32 = arith.constant 0 : i32
    %c0_i32_0 = arith.constant 0 : i32
    return %c0_i32, %arg1 : i32, i32
  }
  func.func @transform_3(%arg0: i32, %arg1: i32) -> (i32, i32) {
    %c0_i32 = arith.constant 0 : i32
    %c0_i32_0 = arith.constant 0 : i32
    return %arg1, %c0_i32 : i32, i32
  }
  func.func @transform_4(%arg0: i32, %arg1: i32) -> (i32, i32) {
    %c0_i32 = arith.constant 0 : i32
    %c0_i32_0 = arith.constant 0 : i32
    %c0_i32_1 = arith.constant 0 : i32
    return %c0_i32, %c0_i32_0 : i32, i32
  }
  func.func @transform_5(%arg0: i32, %arg1: i32) -> (i32, i32) {
    %c0_i32 = arith.constant 0 : i32
    %c0_i32_0 = arith.constant 0 : i32
    return %arg0, %c0_i32 : i32, i32
  }
}

</mosaic_0001>

<llo_original>
// kernel: fnn_forward.1
$region0: #{fnn_forward.1}
  #allocation0 [shape = 'u32[]', space=smem, size = 0x4, offset = 0x4, fixed_abs, tag = 'smem constant byte address 0x4 - core index']
  #allocation1 [shape = 'u32[144,128]{1,0:T(1,128)}', space=vmem, size = 0x12000, scoped, tag = 'internal scratch']
  #allocation2 [shape = 'f32[128,1]{1,0:T(8,128)}', space=vmem, size = 0x10000, scoped, tag = 'scratch operand']
  #allocation3 [shape = 'f32[128,1]{1,0:T(8,128)}', space=vmem, size = 0x10000, scoped, tag = 'scratch operand']
  #allocation4 [shape = 'f32[128,128]{1,0:T(8,128)}', space=vmem, size = 0x10000, scoped, tag = 'scratch operand']
  %s0 = inlined_call_operand.vmem [shape: bf16[128,128], index: 0, kind: input, shape index: {}]
  %s1 = inlined_call_operand.hbm [shape: bf16[128,640], index: 1, kind: input, shape index: {}]
  %s2 = inlined_call_operand.vmem [shape: f32[1,640], index: 2, kind: input, shape index: {}]
  %s3 = inlined_call_operand.hbm [shape: bf16[640,128], index: 3, kind: input, shape index: {}]
  %s4 = inlined_call_operand.vmem [shape: f32[1,128], index: 4, kind: input, shape index: {}]
  %s5 = inlined_call_operand.vmem [shape: f32[128,128], index: 5, kind: output, shape index: {}]
  %s6 = sld [smem:[#allocation0]]
  $region69: #{fnn_forward.1} parent=0
    _
  %s8 = ssub.s32 1, %s6
  %s9 = scalar_select 0, %s8, %s6
  $region1: #{fnn_forward.1} parent=0
    #allocation5 [shape = 'u8[65536]{0}', space=vmem, size = 0x10000, scoped, tag = 'input window, operand 1']
    #allocation6 [shape = 's32[2]{0}', space=sflag, size = 0x8, scoped, tag = 'scoped memory for fnn_forward.1']
    #allocation7 [shape = 'u8[65536]{0}', space=vmem, size = 0x10000, scoped, tag = 'input window, operand 3']
    #allocation8 [shape = 's32[2]{0}', space=sflag, size = 0x8, scoped, tag = 'scoped memory for fnn_forward.1']
    %10 = vsyncpa [#allocation6], 0
    %s11 = scalar_lea.sflag [#allocation6], 1
    %12 = vsyncpa %s11, 0
    %13 = vsyncpa [#allocation8], 0
    %s14 = scalar_lea.sflag [#allocation8], 1
    %15 = vsyncpa %s14, 0
    loop: start=0, step=1, limit=7
    $region2: #{fnn_forward.1} parent=1 // loop_pre_header
      _
    $region3: #{fnn_forward.1} parent=1 // loop_header
      %s17 = sphi 0, %s21
      %p18 = scmp.ge.s32.totalorder %s17, 7
      %s24 = sphi 0, %s36
      %s25 = sphi 0, %s32
      %s26 = sphi 0, %s24
      %s27 = sphi 0, %s25
      %s28 = sphi 0, %s26
      %s29 = sphi 0, %s27
      %s39 = sphi 0, %s41
      %s42 = sphi 0, %s39
      %s43 = sphi 0, %s42
      %s59 = sphi 0, %s43
      %s65 = sphi 0, %s67
      %s68 = sphi 0, %s65
      %s69 = sphi 0, %s68
      %s85 = sphi 0, %s69
      %s91 = sphi 0, %s93
      %s94 = sphi 0, %s91
      %s95 = sphi 0, %s94
      %s111 = sphi 0, %s95
      %s117 = sphi 0, %s119
      %s120 = sphi 0, %s117
      %s121 = sphi 0, %s120
      %s137 = sphi 0, %s121
      %s141 = sphi 0, %s141
      %s143 = sphi 0, %s141
      %s144 = sphi 0, %s143
      %s158 = sphi 0, %s144
      %s164 = sphi 0, %s166
      %s167 = sphi 0, %s164
      %s168 = sphi 0, %s167
      %s184 = sphi 0, %s168
    $region4: #{fnn_forward.1} parent=1 // loop_header_branch
      %20 = sbr.rel (%p18) target = $region8
    $region5: #{fnn_forward.1} parent=1 // loop_body
      %s22 = ssub.s32 %s17, 1
      %s23 = ssub.s32 %s17, 2
      %s30 = sadd.s32 1, %s25
      %p31 = scmp.ge.s32.totalorder %s30, 5
      %s32 = scalar_select %p31, 0, %s30
      %s33 = sadd.s32 1, %s24
      %s34 = scalar_select %p31, %s33, %s24
      %p35 = scmp.ge.s32.totalorder %s34, 1
      %s36 = scalar_select %p35, 0, %s34
      %s37 = ssub.s32 %s24, %s36
      %p38 = scmp.eq.s32.totalorder %s37, 0
      %s40 = sadd.s32 %s39, 1
      %s41 = scalar_select %p38, %s39, %s40
      %p44 = pneg %p38
      %p45 = scmp.eq.s32.totalorder %s17, 4
      %p46 = por %p44, %p45
      %p47 = scmp.ne.s32.totalorder %s39, %s42
      %p48 = scmp.eq.s32.totalorder %s17, 0
      %p49 = por %p47, %p48
      %p50 = scmp.ne.s32.totalorder %s39, %s42
      %p51 = scmp.eq.s32.totalorder %s22, 4
      %p52 = por %p50, %p51
      %p53 = scmp.ne.s32.totalorder %s42, %s43
      %p54 = scmp.eq.s32.totalorder %s22, 0
      %p55 = por %p53, %p54
      %p56 = scmp.ne.s32.totalorder %s42, %s43
      %p57 = scmp.eq.s32.totalorder %s23, 4
      %p58 = por %p56, %p57
      %p60 = scmp.ne.s32.totalorder %s43, %s59
      %p61 = scmp.eq.s32.totalorder %s23, 0
      %p62 = por %p60, %p61
      %s63 = ssub.s32 %s25, %s32
      %p64 = scmp.eq.s32.totalorder %s63, 0
      %s66 = sadd.s32 %s65, 1
      %s67 = scalar_select %p64, %s65, %s66
      %p70 = pneg %p64
      %p71 = scmp.eq.s32.totalorder %s17, 4
      %p72 = por %p70, %p71
      %p73 = scmp.ne.s32.totalorder %s65, %s68
      %p74 = scmp.eq.s32.totalorder %s17, 0
      %p75 = por %p73, %p74
      %p76 = scmp.ne.s32.totalorder %s65, %s68
      %p77 = scmp.eq.s32.totalorder %s22, 4
      %p78 = por %p76, %p77
      %p79 = scmp.ne.s32.totalorder %s68, %s69
      %p80 = scmp.eq.s32.totalorder %s22, 0
      %p81 = por %p79, %p80
      %p82 = scmp.ne.s32.totalorder %s68, %s69
      %p83 = scmp.eq.s32.totalorder %s23, 4
      %p84 = por %p82, %p83
      %p86 = scmp.ne.s32.totalorder %s69, %s85
      %p87 = scmp.eq.s32.totalorder %s23, 0
      %p88 = por %p86, %p87
      %s89 = ssub.s32 %s25, %s32
      %p90 = scmp.eq.s32.totalorder %s89, 0
      %s92 = sadd.s32 %s91, 1
      %s93 = scalar_select %p90, %s91, %s92
      %p96 = pneg %p90
      %p97 = scmp.eq.s32.totalorder %s17, 4
      %p98 = por %p96, %p97
      %p99 = scmp.ne.s32.totalorder %s91, %s94
      %p100 = scmp.eq.s32.totalorder %s17, 0
      %p101 = por %p99, %p100
      %p102 = scmp.ne.s32.totalorder %s91, %s94
      %p103 = scmp.eq.s32.totalorder %s22, 4
      %p104 = por %p102, %p103
      %p105 = scmp.ne.s32.totalorder %s94, %s95
      %p106 = scmp.eq.s32.totalorder %s22, 0
      %p107 = por %p105, %p106
      %p108 = scmp.ne.s32.totalorder %s94, %s95
      %p109 = scmp.eq.s32.totalorder %s23, 4
      %p110 = por %p108, %p109
      %p112 = scmp.ne.s32.totalorder %s95, %s111
      %p113 = scmp.eq.s32.totalorder %s23, 0
      %p114 = por %p112, %p113
      %s115 = ssub.s32 %s25, %s32
      %p116 = scmp.eq.s32.totalorder %s115, 0
      %s118 = sadd.s32 %s117, 1
      %s119 = scalar_select %p116, %s117, %s118
      %p122 = pneg %p116
      %p123 = scmp.eq.s32.totalorder %s17, 4
      %p124 = por %p122, %p123
      %p125 = scmp.ne.s32.totalorder %s117, %s120
      %p126 = scmp.eq.s32.totalorder %s17, 0
      %p127 = por %p125, %p126
      %p128 = scmp.ne.s32.totalorder %s117, %s120
      %p129 = scmp.eq.s32.totalorder %s22, 4
      %p130 = por %p128, %p129
      %p131 = scmp.ne.s32.totalorder %s120, %s121
      %p132 = scmp.eq.s32.totalorder %s22, 0
      %p133 = por %p131, %p132
      %p134 = scmp.ne.s32.totalorder %s120, %s121
      %p135 = scmp.eq.s32.totalorder %s23, 4
      %p136 = por %p134, %p135
      %p138 = scmp.ne.s32.totalorder %s121, %s137
      %p139 = scmp.eq.s32.totalorder %s23, 0
      %p140 = por %p138, %p139
      %s142 = sadd.s32 %s141, 1
      %p145 = scmp.eq.s32.totalorder %s17, 4
      %p146 = scmp.ne.s32.totalorder %s141, %s143
      %p147 = scmp.eq.s32.totalorder %s17, 0
      %p148 = por %p146, %p147
      %p149 = scmp.ne.s32.totalorder %s141, %s143
      %p150 = scmp.eq.s32.totalorder %s22, 4
      %p151 = por %p149, %p150
      %p152 = scmp.ne.s32.totalorder %s143, %s144
      %p153 = scmp.eq.s32.totalorder %s22, 0
      %p154 = por %p152, %p153
      %p155 = scmp.ne.s32.totalorder %s143, %s144
      %p156 = scmp.eq.s32.totalorder %s23, 4
      %p157 = por %p155, %p156
      %p159 = scmp.ne.s32.totalorder %s144, %s158
      %p160 = scmp.eq.s32.totalorder %s23, 0
      %p161 = por %p159, %p160
      %s162 = ssub.s32 %s24, %s36
      %p163 = scmp.eq.s32.totalorder %s162, 0
      %s165 = sadd.s32 %s164, 1
      %s166 = scalar_select %p163, %s164, %s165
      %p169 = pneg %p163
      %p170 = scmp.eq.s32.totalorder %s17, 4
      %p171 = por %p169, %p170
      %p172 = scmp.ne.s32.totalorder %s164, %s167
      %p173 = scmp.eq.s32.totalorder %s17, 0
      %p174 = por %p172, %p173
      %p175 = scmp.ne.s32.totalorder %s164, %s167
      %p176 = scmp.eq.s32.totalorder %s22, 4
      %p177 = por %p175, %p176
      %p178 = scmp.ne.s32.totalorder %s167, %s168
      %p179 = scmp.eq.s32.totalorder %s22, 0
      %p180 = por %p178, %p179
      %p181 = scmp.ne.s32.totalorder %s167, %s168
      %p182 = scmp.eq.s32.totalorder %s23, 4
      %p183 = por %p181, %p182
      %p185 = scmp.ne.s32.totalorder %s168, %s184
      %p186 = scmp.eq.s32.totalorder %s23, 0
      %p187 = por %p185, %p186
      %p188 = scmp.le.s32.totalorder 1, %s17
      %p189 = scmp.lt.s32.totalorder %s17, 6
      %p190 = pnand %p188, %p189
      %p191 = pneg %p190
      // Predicated region
      $region9: #{fnn_forward.1} parent=5 // pred_check
        _
      $region10: #{fnn_forward.1} parent=5 // pred_check_branch
        %193 = sbr.rel (%p190) target = $region12
      $region11: #{fnn_forward.1} parent=5 // pred_region
        %s194 = ssub.s32 %s17, 1
        // Predicated region
        $region13: #{fnn_forward.1} parent=11 // pred_check
          %p195 = pneg %p55
        $region14: #{fnn_forward.1} parent=11 // pred_check_branch
          %197 = sbr.rel (%p195) target = $region16
        $region15: #{fnn_forward.1} parent=11 // pred_region
          %s198 = smul.u32 16, %s26
          %p199 = scmp.lt.s32.totalorder %s198, 15
          %s200 = scalar_select %p199, %s198, 15
          %s201 = smul.addr %s200, 4
          %s202 = scalar_lea.vmem %s0, %s201
          %s203 = smul.u32 16, %s26
        $region16: #{fnn_forward.1} parent=11 // pred_fallthru
          _
        // Predicated region
        $region17: #{fnn_forward.1} parent=11 // pred_check
          %p204 = pneg %p154
        $region18: #{fnn_forward.1} parent=11 // pred_check_branch
          %206 = sbr.rel (%p204) target = $region20
        $region19: #{fnn_forward.1} parent=11 // pred_region
          _
        $region20: #{fnn_forward.1} parent=11 // pred_fallthru
          _
      $region12: #{fnn_forward.1} parent=5 // pred_fallthru
        _
      %p207 = scmp.lt.s32.totalorder %s17, 5
      // Predicated region
      $region21: #{fnn_forward.1} parent=5 // pred_check
        %p208 = pneg %p207
      $region22: #{fnn_forward.1} parent=5 // pred_check_branch
        %210 = sbr.rel (%p208) target = $region24
      $region23: #{fnn_forward.1} parent=5 // pred_region
        // Predicated region
        $region25: #{fnn_forward.1} parent=23 // pred_check
          %p211 = pneg %p75
        $region26: #{fnn_forward.1} parent=23 // pred_check_branch
          %213 = sbr.rel (%p211) target = $region28
        $region27: #{fnn_forward.1} parent=23 // pred_region
          %s214 = sand.u32 %s65, 1
          %s215 = scalar_lea.sflag [#allocation6], %s214
          %s216 = sand.u32 %s65, 1
          %s217 = smul.addr %s216, 64
          %s218 = scalar_lea.vmem [#allocation5], %s217
          %s220 = ssub.s32 1024, 1024
          %221 = vsyncadd %s215, %s220
          %s222 = smul.addr %s25, 64
          %s223 = scalar_lea.hbm %s1, %s222
          %s224 = sshll.u32 %s218, 4
          %s225 = int_to_ptr.vmem [resolvable:$true] %s224
          %230 = dma.hbm_to_vmem [thread:$0]  %s223, 1024, %s225, %s215, 320, 64, 4
        $region28: #{fnn_forward.1} parent=23 // pred_fallthru
          _
        // Predicated region
        $region29: #{fnn_forward.1} parent=23 // pred_check
          %p231 = pneg %p101
        $region30: #{fnn_forward.1} parent=23 // pred_check_branch
          %233 = sbr.rel (%p231) target = $region32
        $region31: #{fnn_forward.1} parent=23 // pred_region
          %p234 = scmp.lt.s32.totalorder %s25, 4
          %s235 = scalar_select %p234, %s25, 4
          %s236 = scalar_lea.vmem %s2, %s235
        $region32: #{fnn_forward.1} parent=23 // pred_fallthru
          _
        // Predicated region
        $region33: #{fnn_forward.1} parent=23 // pred_check
          %p237 = pneg %p127
        $region34: #{fnn_forward.1} parent=23 // pred_check_branch
          %239 = sbr.rel (%p237) target = $region36
        $region35: #{fnn_forward.1} parent=23 // pred_region
          %s240 = sand.u32 %s117, 1
          %s241 = scalar_lea.sflag [#allocation8], %s240
          %s242 = sand.u32 %s117, 1
          %s243 = smul.addr %s242, 64
          %s244 = scalar_lea.vmem [#allocation7], %s243
          %s245 = smul.u32 16, %s25
          %s247 = ssub.s32 1024, 1024
          %248 = vsyncadd %s241, %s247
          %s249 = smul.addr %s245, 64
          %s250 = scalar_lea.hbm %s3, %s249
          %s251 = sshll.u32 %s244, 4
          %s252 = int_to_ptr.vmem [resolvable:$true] %s251
          %257 = dma.hbm_to_vmem [thread:$0]  %s250, 1024, %s252, %s241, 64, 64, 4
        $region36: #{fnn_forward.1} parent=23 // pred_fallthru
          _
      $region24: #{fnn_forward.1} parent=5 // pred_fallthru
        _
      %p258 = scmp.le.s32.totalorder 1, %s17
      %p259 = scmp.lt.s32.totalorder %s17, 6
      %p260 = pnand %p258, %p259
      %p261 = pneg %p260
      // Predicated region
      $region37: #{fnn_forward.1} parent=5 // pred_check
        _
      $region38: #{fnn_forward.1} parent=5 // pred_check_branch
        %263 = sbr.rel (%p260) target = $region40
      $region39: #{fnn_forward.1} parent=5 // pred_region
        %s264 = ssub.s32 %s17, 1
        %s265 = sand.u32 %s68, 1
        %s266 = scalar_lea.sflag [#allocation6], %s265
        %s267 = sand.u32 %s68, 1
        %s268 = smul.addr %s267, 64
        %s269 = scalar_lea.vmem [#allocation5], %s268
        // Predicated region
        $region41: #{fnn_forward.1} parent=39 // pred_check
          %p270 = pneg %p81
        $region42: #{fnn_forward.1} parent=39 // pred_check_branch
          %272 = sbr.rel (%p270) target = $region44
        $region43: #{fnn_forward.1} parent=39 // pred_region
          %273 = dma.done %s266, 1024
        $region44: #{fnn_forward.1} parent=39 // pred_fallthru
          _
        %s274 = sand.u32 %s120, 1
        %s275 = scalar_lea.sflag [#allocation8], %s274
        %s276 = sand.u32 %s120, 1
        %s277 = smul.addr %s276, 64
        %s278 = scalar_lea.vmem [#allocation7], %s277
        // Predicated region
        $region45: #{fnn_forward.1} parent=39 // pred_check
          %p279 = pneg %p133
        $region46: #{fnn_forward.1} parent=39 // pred_check_branch
          %281 = sbr.rel (%p279) target = $region48
        $region47: #{fnn_forward.1} parent=39 // pred_region
          %282 = dma.done %s275, 1024
        $region48: #{fnn_forward.1} parent=39 // pred_fallthru
          _
        %s283 = smul.u32 16, %s26
        %p284 = scmp.lt.s32.totalorder %s283, 15
        %s285 = scalar_select %p284, %s283, 15
        %s286 = smul.addr %s285, 4
        %s287 = scalar_lea.vmem %s0, %s286
        %p288 = pneg %p55
        %p289 = pneg %p52
        %s290 = sand.u32 %s68, 1
        %s291 = scalar_lea.sflag [#allocation6], %s290
        %s292 = sand.u32 %s68, 1
        %s293 = smul.addr %s292, 64
        %s294 = scalar_lea.vmem [#allocation5], %s293
        %p295 = pneg %p81
        %p296 = pneg %p78
        %p297 = scmp.lt.s32.totalorder %s27, 4
        %s298 = scalar_select %p297, %s27, 4
        %s299 = scalar_lea.vmem %s2, %s298
        %p300 = pneg %p107
        %p301 = pneg %p104
        %s302 = sand.u32 %s120, 1
        %s303 = scalar_lea.sflag [#allocation8], %s302
        %s304 = sand.u32 %s120, 1
        %s305 = smul.addr %s304, 64
        %s306 = scalar_lea.vmem [#allocation7], %s305
        %p307 = pneg %p133
        %p308 = pneg %p130
        %p309 = pneg %p154
        %p310 = pneg %p151
        %p311 = pneg %p180
        %p312 = pneg %p177
        %s313 = smul.u32 16, %s26
        %p314 = scmp.lt.s32.totalorder %s313, 15
        %s315 = scalar_select %p314, %s313, 15
        %s316 = smul.addr %s315, 8
        %s317 = scalar_lea.vmem %s5, %s316
        %s318 = smul.u32 16, %s26
        %p319 = scmp.lt.s32.totalorder %s318, 15
        %s320 = scalar_select %p319, %s318, 15
        %s321 = smul.addr %s320, 4
        %s322 = scalar_lea.vmem %s0, %s321
        %s323 = smul.u32 16, %s26
        %p324 = scmp.lt.s32.totalorder %s27, 4
        %s325 = scalar_select %p324, %s27, 4
        %s326 = scalar_lea.vmem %s2, %s325
        %s327 = smul.u32 16, %s27
        %s328 = smul.u32 16, %s26
        %p329 = scmp.lt.s32.totalorder %s328, 15
        %s330 = scalar_select %p329, %s328, 15
        %s331 = smul.addr %s330, 8
        %s332 = scalar_lea.vmem %s5, %s331
        %s333 = smul.u32 16, %s26
        %p335 = scmp.eq.s32.totalorder %s27, 0
        // Predicated region
        $region49: #{fnn_forward.1} parent=39 // pred_check
          %p336 = pneg %p335
        $region50: #{fnn_forward.1} parent=39 // pred_check_branch
          %338 = sbr.rel (%p336) target = $region52
        $region51: #{fnn_forward.1} parent=39 // pred_region
          %vm339 = vcmask 7168
          %340 = vst.msk [vmem:[#allocation2] sm:$0xff] %vm339, -inf
          %341 = vst.msk [vmem:[#allocation2 + $0x8] sm:$0xff] %vm339, -inf
          %342 = vst.msk [vmem:[#allocation2 + $0x10] sm:$0xff] %vm339, -inf
          %343 = vst.msk [vmem:[#allocation2 + $0x18] sm:$0xff] %vm339, -inf
          %344 = vst.msk [vmem:[#allocation2 + $0x20] sm:$0xff] %vm339, -inf
          %345 = vst.msk [vmem:[#allocation2 + $0x28] sm:$0xff] %vm339, -inf
          %346 = vst.msk [vmem:[#allocation2 + $0x30] sm:$0xff] %vm339, -inf
          %347 = vst.msk [vmem:[#allocation2 + $0x38] sm:$0xff] %vm339, -inf
          %348 = vst.msk [vmem:[#allocation2 + $0x40] sm:$0xff] %vm339, -inf
          %349 = vst.msk [vmem:[#allocation2 + $0x48] sm:$0xff] %vm339, -inf
          %350 = vst.msk [vmem:[#allocation2 + $0x50] sm:$0xff] %vm339, -inf
          %351 = vst.msk [vmem:[#allocation2 + $0x58] sm:$0xff] %vm339, -inf
          %352 = vst.msk [vmem:[#allocation2 + $0x60] sm:$0xff] %vm339, -inf
          %353 = vst.msk [vmem:[#allocation2 + $0x68] sm:$0xff] %vm339, -inf
          %354 = vst.msk [vmem:[#allocation2 + $0x70] sm:$0xff] %vm339, -inf
          %355 = vst.msk [vmem:[#allocation2 + $0x78] sm:$0xff] %vm339, -inf
          %356 = vst.msk [vmem:[#allocation3] sm:$0xff] %vm339, 0.0
          %357 = vst.msk [vmem:[#allocation3 + $0x8] sm:$0xff] %vm339, 0.0
          %358 = vst.msk [vmem:[#allocation3 + $0x10] sm:$0xff] %vm339, 0.0
          %359 = vst.msk [vmem:[#allocation3 + $0x18] sm:$0xff] %vm339, 0.0
          %360 = vst.msk [vmem:[#allocation3 + $0x20] sm:$0xff] %vm339, 0.0
          %361 = vst.msk [vmem:[#allocation3 + $0x28] sm:$0xff] %vm339, 0.0
          %362 = vst.msk [vmem:[#allocation3 + $0x30] sm:$0xff] %vm339, 0.0
          %363 = vst.msk [vmem:[#allocation3 + $0x38] sm:$0xff] %vm339, 0.0
          %364 = vst.msk [vmem:[#allocation3 + $0x40] sm:$0xff] %vm339, 0.0
          %365 = vst.msk [vmem:[#allocation3 + $0x48] sm:$0xff] %vm339, 0.0
          %366 = vst.msk [vmem:[#allocation3 + $0x50] sm:$0xff] %vm339, 0.0
          %367 = vst.msk [vmem:[#allocation3 + $0x58] sm:$0xff] %vm339, 0.0
          %368 = vst.msk [vmem:[#allocation3 + $0x60] sm:$0xff] %vm339, 0.0
          %369 = vst.msk [vmem:[#allocation3 + $0x68] sm:$0xff] %vm339, 0.0
          %370 = vst.msk [vmem:[#allocation3 + $0x70] sm:$0xff] %vm339, 0.0
          %371 = vst.msk [vmem:[#allocation3 + $0x78] sm:$0xff] %vm339, 0.0
          %372 = vst [vmem:[#allocation4] sm:$0xff] 0.0
          %373 = vst [vmem:[#allocation4 + $0x8] sm:$0xff] 0.0
          %374 = vst [vmem:[#allocation4 + $0x10] sm:$0xff] 0.0
          %375 = vst [vmem:[#allocation4 + $0x18] sm:$0xff] 0.0
          %376 = vst [vmem:[#allocation4 + $0x20] sm:$0xff] 0.0
          %377 = vst [vmem:[#allocation4 + $0x28] sm:$0xff] 0.0
          %378 = vst [vmem:[#allocation4 + $0x30] sm:$0xff] 0.0
          %379 = vst [vmem:[#allocation4 + $0x38] sm:$0xff] 0.0
          %380 = vst [vmem:[#allocation4 + $0x40] sm:$0xff] 0.0
          %381 = vst [vmem:[#allocation4 + $0x48] sm:$0xff] 0.0
          %382 = vst [vmem:[#allocation4 + $0x50] sm:$0xff] 0.0
          %383 = vst [vmem:[#allocation4 + $0x58] sm:$0xff] 0.0
          %384 = vst [vmem:[#allocation4 + $0x60] sm:$0xff] 0.0
          %385 = vst [vmem:[#allocation4 + $0x68] sm:$0xff] 0.0
          %386 = vst [vmem:[#allocation4 + $0x70] sm:$0xff] 0.0
          %387 = vst [vmem:[#allocation4 + $0x78] sm:$0xff] 0.0
        $region52: #{fnn_forward.1} parent=39 // pred_fallthru
          _
        %v388 = vld [vmem:[%s322] sm:$0xf]
        %v389 = vld [vmem:[%s322 + $0x4] sm:$0xf]
        %v390 = vld [vmem:[%s322 + $0x8] sm:$0xf]
        %v391 = vld [vmem:[%s322 + $0xc] sm:$0xf]
        %v392 = vld [vmem:[%s322 + $0x10] sm:$0xf]
        %v393 = vld [vmem:[%s322 + $0x14] sm:$0xf]
        %v394 = vld [vmem:[%s322 + $0x18] sm:$0xf]
        %v395 = vld [vmem:[%s322 + $0x1c] sm:$0xf]
        %v396 = vld [vmem:[%s322 + $0x20] sm:$0xf]
        %v397 = vld [vmem:[%s322 + $0x24] sm:$0xf]
        %v398 = vld [vmem:[%s322 + $0x28] sm:$0xf]
        %v399 = vld [vmem:[%s322 + $0x2c] sm:$0xf]
        %v400 = vld [vmem:[%s322 + $0x30] sm:$0xf]
        %v401 = vld [vmem:[%s322 + $0x34] sm:$0xf]
        %v402 = vld [vmem:[%s322 + $0x38] sm:$0xf]
        %v403 = vld [vmem:[%s322 + $0x3c] sm:$0xf]
        %v404 = vld [vmem:[%s269] sm:$0xf]
        %v405 = vld [vmem:[%s269 + $0x4] sm:$0xf]
        %v406 = vld [vmem:[%s269 + $0x8] sm:$0xf]
        %v407 = vld [vmem:[%s269 + $0xc] sm:$0xf]
        %v408 = vld [vmem:[%s269 + $0x10] sm:$0xf]
        %v409 = vld [vmem:[%s269 + $0x14] sm:$0xf]
        %v410 = vld [vmem:[%s269 + $0x18] sm:$0xf]
        %v411 = vld [vmem:[%s269 + $0x1c] sm:$0xf]
        %v412 = vld [vmem:[%s269 + $0x20] sm:$0xf]
        %v413 = vld [vmem:[%s269 + $0x24] sm:$0xf]
        %v414 = vld [vmem:[%s269 + $0x28] sm:$0xf]
        %v415 = vld [vmem:[%s269 + $0x2c] sm:$0xf]
        %v416 = vld [vmem:[%s269 + $0x30] sm:$0xf]
        %v417 = vld [vmem:[%s269 + $0x34] sm:$0xf]
        %v418 = vld [vmem:[%s269 + $0x38] sm:$0xf]
        %v419 = vld [vmem:[%s269 + $0x3c] sm:$0xf]
        %v420 = vld [vmem:[%s326] sm:$0x1]
        %v422 = vlaneseq
        %v423 = vshrl.u32 %v422, 7
        %v424 = vsub.s32 0, %v423
        %v425 = vrot.slane %v420, %v424
        %v443 = vunpack.c.l.b16 %v388
        %v444 = vunpack.c.l.b16 %v389
        %v445 = vunpack.c.l.b16 %v390
        %v446 = vunpack.c.l.b16 %v391
        %v447 = vunpack.c.l.b16 %v392
        %v448 = vunpack.c.l.b16 %v393
        %v449 = vunpack.c.l.b16 %v394
        %v450 = vunpack.c.l.b16 %v395
        %v451 = vunpack.c.l.b16 %v396
        %v452 = vunpack.c.l.b16 %v397
        %v453 = vunpack.c.l.b16 %v398
        %v454 = vunpack.c.l.b16 %v399
        %v455 = vunpack.c.l.b16 %v400
        %v456 = vunpack.c.l.b16 %v401
        %v457 = vunpack.c.l.b16 %v402
        %v458 = vunpack.c.l.b16 %v403
        %v459 = vpack.c.b16 %v444, %v443
        %v460 = vpack.c.b16 %v446, %v445
        %v461 = vpack.c.b16 %v448, %v447
        %v462 = vpack.c.b16 %v450, %v449
        %v463 = vpack.c.b16 %v452, %v451
        %v464 = vpack.c.b16 %v454, %v453
        %v465 = vpack.c.b16 %v456, %v455
        %v466 = vpack.c.b16 %v458, %v457
        %v491 = vunpack.c.l.b16 %v404
        %v492 = vunpack.c.l.b16 %v405
        %v493 = vunpack.c.l.b16 %v406
        %v494 = vunpack.c.l.b16 %v407
        %v495 = vunpack.c.l.b16 %v408
        %v496 = vunpack.c.l.b16 %v409
        %v497 = vunpack.c.l.b16 %v410
        %v498 = vunpack.c.l.b16 %v411
        %v499 = vunpack.c.l.b16 %v412
        %v500 = vunpack.c.l.b16 %v413
        %v501 = vunpack.c.l.b16 %v414
        %v502 = vunpack.c.l.b16 %v415
        %v503 = vunpack.c.l.b16 %v416
        %v504 = vunpack.c.l.b16 %v417
        %v505 = vunpack.c.l.b16 %v418
        %v506 = vunpack.c.l.b16 %v419
        %v507 = vpack.c.b16 %v492, %v491
        %v508 = vpack.c.b16 %v494, %v493
        %v509 = vpack.c.b16 %v496, %v495
        %v510 = vpack.c.b16 %v498, %v497
        %v511 = vpack.c.b16 %v500, %v499
        %v512 = vpack.c.b16 %v502, %v501
        %v513 = vpack.c.b16 %v504, %v503
        %v514 = vpack.c.b16 %v506, %v505
        %523 = vmatprep.subr.bf16.mxu0 0
        %524 = vmatpush1.bf16.msra.mxu0 %v507
        %525 = vmatprep.subr.bf16.mxu0 0
        %526 = vmatpush1.bf16.msra.mxu0 %v508
        %527 = vmatprep.subr.bf16.mxu0 0
        %528 = vmatpush1.bf16.msra.mxu0 %v509
        %529 = vmatprep.subr.bf16.mxu0 0
        %530 = vmatpush1.bf16.msra.mxu0 %v510
        %531 = vmatprep.subr.bf16.mxu0 0
        %532 = vmatpush1.bf16.msra.mxu0 %v511
        %533 = vmatprep.subr.bf16.mxu0 0
        %534 = vmatpush1.bf16.msra.mxu0 %v512
        %535 = vmatprep.subr.bf16.mxu0 0
        %536 = vmatpush1.bf16.msra.mxu0 %v513
        %537 = vmatprep.subr.bf16.mxu0 0
        %538 = vmatpush1.bf16.msra.mxu0 %v514
        %539 = vmatprep.subr.bf16.mxu0 0
        %540 = vmatpush1.bf16.msra.mxu0 0
        %541 = vmatprep.subr.bf16.mxu0 0
        %542 = vmatpush1.bf16.msra.mxu0 0
        %543 = vmatprep.subr.bf16.mxu0 0
        %544 = vmatpush1.bf16.msra.mxu0 0
        %545 = vmatprep.subr.bf16.mxu0 0
        %546 = vmatpush1.bf16.msra.mxu0 0
        %547 = vmatprep.subr.bf16.mxu0 0
        %548 = vmatpush1.bf16.msra.mxu0 0
        %549 = vmatprep.subr.bf16.mxu0 0
        %550 = vmatpush1.bf16.msra.mxu0 0
        %551 = vmatprep.subr.bf16.mxu0 0
        %552 = vmatpush1.bf16.msra.mxu0 0
        %553 = vmatprep.subr.bf16.mxu0 0
        %554 = vmatpush1.bf16.msra.mxu0 0
        %555 = vmatprep.mubr.bf16.mxu0 0
        %556 = vmatmul.mubr.bf16.gmra.mrb[0].mxu0 %v459
        %v557 = vpop.f32.mrb[0].mxu0
        %v558 = vadd.f32 %v425, %v557
        %v559 = vpop.f32.mrb[0].mxu0
        %v560 = vpop.f32.mrb[0].mxu0
        %v561 = vadd.f32 %v425, %v560
        %v562 = vpop.f32.mrb[0].mxu0
        %563 = vmatprep.mubr.bf16.mxu0 0
        %564 = vmatmul.mubr.bf16.gmra.mrb[0].mxu0 %v460
        %v565 = vpop.f32.mrb[0].mxu0
        %v566 = vadd.f32 %v425, %v565
        %v567 = vpop.f32.mrb[0].mxu0
        %v568 = vpop.f32.mrb[0].mxu0
        %v569 = vadd.f32 %v425, %v568
        %v570 = vpop.f32.mrb[0].mxu0
        %571 = vmatprep.mubr.bf16.mxu0 0
        %572 = vmatmul.mubr.bf16.gmra.mrb[0].mxu0 %v461
        %v573 = vpop.f32.mrb[0].mxu0
        %v574 = vadd.f32 %v425, %v573
        %v575 = vpop.f32.mrb[0].mxu0
        %v576 = vpop.f32.mrb[0].mxu0
        %v577 = vadd.f32 %v425, %v576
        %v578 = vpop.f32.mrb[0].mxu0
        %579 = vmatprep.mubr.bf16.mxu0 0
        %580 = vmatmul.mubr.bf16.gmra.mrb[0].mxu0 %v462
        %v581 = vpop.f32.mrb[0].mxu0
        %v582 = vadd.f32 %v425, %v581
        %v583 = vpop.f32.mrb[0].mxu0
        %v584 = vpop.f32.mrb[0].mxu0
        %v585 = vadd.f32 %v425, %v584
        %v586 = vpop.f32.mrb[0].mxu0
        %587 = vmatprep.mubr.bf16.mxu0 0
        %588 = vmatmul.mubr.bf16.gmra.mrb[0].mxu0 %v463
        %v589 = vpop.f32.mrb[0].mxu0
        %v590 = vadd.f32 %v425, %v589
        %v591 = vpop.f32.mrb[0].mxu0
        %v592 = vpop.f32.mrb[0].mxu0
        %v593 = vadd.f32 %v425, %v592
        %v594 = vpop.f32.mrb[0].mxu0
        %595 = vmatprep.mubr.bf16.mxu0 0
        %596 = vmatmul.mubr.bf16.gmra.mrb[0].mxu0 %v464
        %v597 = vpop.f32.mrb[0].mxu0
        %v598 = vadd.f32 %v425, %v597
        %v599 = vpop.f32.mrb[0].mxu0
        %v600 = vpop.f32.mrb[0].mxu0
        %v601 = vadd.f32 %v425, %v600
        %v602 = vpop.f32.mrb[0].mxu0
        %603 = vmatprep.mubr.bf16.mxu0 0
        %604 = vmatmul.mubr.bf16.gmra.mrb[0].mxu0 %v465
        %v605 = vpop.f32.mrb[0].mxu0
        %v606 = vadd.f32 %v425, %v605
        %v607 = vpop.f32.mrb[0].mxu0
        %v608 = vpop.f32.mrb[0].mxu0
        %v609 = vadd.f32 %v425, %v608
        %v610 = vpop.f32.mrb[0].mxu0
        %611 = vmatprep.mubr.bf16.mxu0 0
        %612 = vmatmul.mubr.bf16.gmra.mrb[0].mxu0 %v466
        %v613 = vpop.f32.mrb[0].mxu0
        %v614 = vadd.f32 %v425, %v613
        %v615 = vpop.f32.mrb[0].mxu0
        %v616 = vpop.f32.mrb[0].mxu0
        %v617 = vadd.f32 %v425, %v616
        %v618 = vpop.f32.mrb[0].mxu0
        %619 = vdwg.mxu0
        %v620 = vld [vmem:[#allocation2] sm:$0xff]
        %v621 = vld [vmem:[#allocation2 + $0x8] sm:$0xff]
        %v622 = vld [vmem:[#allocation2 + $0x10] sm:$0xff]
        %v623 = vld [vmem:[#allocation2 + $0x18] sm:$0xff]
        %v624 = vld [vmem:[#allocation2 + $0x20] sm:$0xff]
        %v625 = vld [vmem:[#allocation2 + $0x28] sm:$0xff]
        %v626 = vld [vmem:[#allocation2 + $0x30] sm:$0xff]
        %v627 = vld [vmem:[#allocation2 + $0x38] sm:$0xff]
        %v628 = vld [vmem:[#allocation2 + $0x40] sm:$0xff]
        %v629 = vld [vmem:[#allocation2 + $0x48] sm:$0xff]
        %v630 = vld [vmem:[#allocation2 + $0x50] sm:$0xff]
        %v631 = vld [vmem:[#allocation2 + $0x58] sm:$0xff]
        %v632 = vld [vmem:[#allocation2 + $0x60] sm:$0xff]
        %v633 = vld [vmem:[#allocation2 + $0x68] sm:$0xff]
        %v634 = vld [vmem:[#allocation2 + $0x70] sm:$0xff]
        %v635 = vld [vmem:[#allocation2 + $0x78] sm:$0xff]
        %636 = vmax.xlane.f32.xlu0 %v558
        %v637 = vpop.xlane.xlu0 %636
        %638 = vmax.xlane.f32.xlu0 %v561
        %v639 = vpop.xlane.xlu0 %638
        %640 = vmax.xlane.f32.xlu0 %v566
        %v641 = vpop.xlane.xlu0 %640
        %642 = vmax.xlane.f32.xlu0 %v569
        %v643 = vpop.xlane.xlu0 %642
        %644 = vmax.xlane.f32.xlu0 %v574
        %v645 = vpop.xlane.xlu0 %644
        %646 = vmax.xlane.f32.xlu0 %v577
        %v647 = vpop.xlane.xlu0 %646
        %648 = vmax.xlane.f32.xlu0 %v582
        %v649 = vpop.xlane.xlu0 %648
        %650 = vmax.xlane.f32.xlu0 %v585
        %v651 = vpop.xlane.xlu0 %650
        %652 = vmax.xlane.f32.xlu0 %v590
        %v653 = vpop.xlane.xlu0 %652
        %654 = vmax.xlane.f32.xlu0 %v593
        %v655 = vpop.xlane.xlu0 %654
        %656 = vmax.xlane.f32.xlu0 %v598
        %v657 = vpop.xlane.xlu0 %656
        %658 = vmax.xlane.f32.xlu0 %v601
        %v659 = vpop.xlane.xlu0 %658
        %660 = vmax.xlane.f32.xlu0 %v606
        %v661 = vpop.xlane.xlu0 %660
        %662 = vmax.xlane.f32.xlu0 %v609
        %v663 = vpop.xlane.xlu0 %662
        %664 = vmax.xlane.f32.xlu0 %v614
        %v665 = vpop.xlane.xlu0 %664
        %666 = vmax.xlane.f32.xlu0 %v617
        %v667 = vpop.xlane.xlu0 %666
        %v668 = vmax.f32 %v620, %v637
        %v669 = vmax.f32 %v621, %v639
        %v670 = vmax.f32 %v622, %v641
        %v671 = vmax.f32 %v623, %v643
        %v672 = vmax.f32 %v624, %v645
        %v673 = vmax.f32 %v625, %v647
        %v674 = vmax.f32 %v626, %v649
        %v675 = vmax.f32 %v627, %v651
        %v676 = vmax.f32 %v628, %v653
        %v677 = vmax.f32 %v629, %v655
        %v678 = vmax.f32 %v630, %v657
        %v679 = vmax.f32 %v631, %v659
        %v680 = vmax.f32 %v632, %v661
        %v681 = vmax.f32 %v633, %v663
        %v682 = vmax.f32 %v634, %v665
        %v683 = vmax.f32 %v635, %v667
        %v684 = vsub.f32 %v620, %v668
        %v685 = vsub.f32 %v621, %v669
        %v686 = vsub.f32 %v622, %v670
        %v687 = vsub.f32 %v623, %v671
        %v688 = vsub.f32 %v624, %v672
        %v689 = vsub.f32 %v625, %v673
        %v690 = vsub.f32 %v626, %v674
        %v691 = vsub.f32 %v627, %v675
        %v692 = vsub.f32 %v628, %v676
        %v693 = vsub.f32 %v629, %v677
        %v694 = vsub.f32 %v630, %v678
        %v695 = vsub.f32 %v631, %v679
        %v696 = vsub.f32 %v632, %v680
        %v697 = vsub.f32 %v633, %v681
        %v698 = vsub.f32 %v634, %v682
        %v699 = vsub.f32 %v635, %v683
        %v700 = vmul.f32 %v684, 1.442695
        %v701 = vpow.pop %v700
        %v702 = vmul.f32 %v685, 1.442695
        %v703 = vpow.pop %v702
        %v704 = vmul.f32 %v686, 1.442695
        %v705 = vpow.pop %v704
        %v706 = vmul.f32 %v687, 1.442695
        %v707 = vpow.pop %v706
        %v708 = vmul.f32 %v688, 1.442695
        %v709 = vpow.pop %v708
        %v710 = vmul.f32 %v689, 1.442695
        %v711 = vpow.pop %v710
        %v712 = vmul.f32 %v690, 1.442695
        %v713 = vpow.pop %v712
        %v714 = vmul.f32 %v691, 1.442695
        %v715 = vpow.pop %v714
        %v716 = vmul.f32 %v692, 1.442695
        %v717 = vpow.pop %v716
        %v718 = vmul.f32 %v693, 1.442695
        %v719 = vpow.pop %v718
        %v720 = vmul.f32 %v694, 1.442695
        %v721 = vpow.pop %v720
        %v722 = vmul.f32 %v695, 1.442695
        %v723 = vpow.pop %v722
        %v724 = vmul.f32 %v696, 1.442695
        %v725 = vpow.pop %v724
        %v726 = vmul.f32 %v697, 1.442695
        %v727 = vpow.pop %v726
        %v728 = vmul.f32 %v698, 1.442695
        %v729 = vpow.pop %v728
        %v730 = vmul.f32 %v699, 1.442695
        %v731 = vpow.pop %v730
        %733 = vset.pattern.permute.xlu0 0
        %734 = vperm.xlu0 %733, %v668
        %v735 = vpop.permute.xlu0 %734
        %738 = vset.pattern.permute.xlu0 0
        %739 = vperm.xlu0 %738, %v669
        %v740 = vpop.permute.xlu0 %739
        %743 = vset.pattern.permute.xlu0 0
        %744 = vperm.xlu0 %743, %v670
        %v745 = vpop.permute.xlu0 %744
        %748 = vset.pattern.permute.xlu0 0
        %749 = vperm.xlu0 %748, %v671
        %v750 = vpop.permute.xlu0 %749
        %753 = vset.pattern.permute.xlu0 0
        %754 = vperm.xlu0 %753, %v672
        %v755 = vpop.permute.xlu0 %754
        %758 = vset.pattern.permute.xlu0 0
        %759 = vperm.xlu0 %758, %v673
        %v760 = vpop.permute.xlu0 %759
        %763 = vset.pattern.permute.xlu0 0
        %764 = vperm.xlu0 %763, %v674
        %v765 = vpop.permute.xlu0 %764
        %768 = vset.pattern.permute.xlu0 0
        %769 = vperm.xlu0 %768, %v675
        %v770 = vpop.permute.xlu0 %769
        %773 = vset.pattern.permute.xlu0 0
        %774 = vperm.xlu0 %773, %v676
        %v775 = vpop.permute.xlu0 %774
        %778 = vset.pattern.permute.xlu0 0
        %779 = vperm.xlu0 %778, %v677
        %v780 = vpop.permute.xlu0 %779
        %783 = vset.pattern.permute.xlu0 0
        %784 = vperm.xlu0 %783, %v678
        %v785 = vpop.permute.xlu0 %784
        %788 = vset.pattern.permute.xlu0 0
        %789 = vperm.xlu0 %788, %v679
        %v790 = vpop.permute.xlu0 %789
        %793 = vset.pattern.permute.xlu0 0
        %794 = vperm.xlu0 %793, %v680
        %v795 = vpop.permute.xlu0 %794
        %798 = vset.pattern.permute.xlu0 0
        %799 = vperm.xlu0 %798, %v681
        %v800 = vpop.permute.xlu0 %799
        %803 = vset.pattern.permute.xlu0 0
        %804 = vperm.xlu0 %803, %v682
        %v805 = vpop.permute.xlu0 %804
        %808 = vset.pattern.permute.xlu0 0
        %809 = vperm.xlu0 %808, %v683
        %v810 = vpop.permute.xlu0 %809
        %v812 = vsub.f32 %v558, %v735
        %v813 = vsub.f32 %v561, %v740
        %v814 = vsub.f32 %v566, %v745
        %v815 = vsub.f32 %v569, %v750
        %v816 = vsub.f32 %v574, %v755
        %v817 = vsub.f32 %v577, %v760
        %v818 = vsub.f32 %v582, %v765
        %v819 = vsub.f32 %v585, %v770
        %v820 = vsub.f32 %v590, %v775
        %v821 = vsub.f32 %v593, %v780
        %v822 = vsub.f32 %v598, %v785
        %v823 = vsub.f32 %v601, %v790
        %v824 = vsub.f32 %v606, %v795
        %v825 = vsub.f32 %v609, %v800
        %v826 = vsub.f32 %v614, %v805
        %v827 = vsub.f32 %v617, %v810
        %v828 = vpack.c.bf16 %v813, %v812
        %v829 = vpack.c.bf16 %v815, %v814
        %v830 = vpack.c.bf16 %v817, %v816
        %v831 = vpack.c.bf16 %v819, %v818
        %v832 = vpack.c.bf16 %v821, %v820
        %v833 = vpack.c.bf16 %v823, %v822
        %v834 = vpack.c.bf16 %v825, %v824
        %v835 = vpack.c.bf16 %v827, %v826
        %v837 = vmul.bf16 %v828, 1069105081
        %v838 = vpow.bf16.pop %v837
        %v840 = vmul.bf16 %v829, 1069105081
        %v841 = vpow.bf16.pop %v840
        %v843 = vmul.bf16 %v830, 1069105081
        %v844 = vpow.bf16.pop %v843
        %v846 = vmul.bf16 %v831, 1069105081
        %v847 = vpow.bf16.pop %v846
        %v849 = vmul.bf16 %v832, 1069105081
        %v850 = vpow.bf16.pop %v849
        %v852 = vmul.bf16 %v833, 1069105081
        %v853 = vpow.bf16.pop %v852
        %v855 = vmul.bf16 %v834, 1069105081
        %v856 = vpow.bf16.pop %v855
        %v858 = vmul.bf16 %v835, 1069105081
        %v859 = vpow.bf16.pop %v858
        %v860 = vld [vmem:[#allocation3] sm:$0xff]
        %v861 = vld [vmem:[#allocation3 + $0x8] sm:$0xff]
        %v862 = vld [vmem:[#allocation3 + $0x10] sm:$0xff]
        %v863 = vld [vmem:[#allocation3 + $0x18] sm:$0xff]
        %v864 = vld [vmem:[#allocation3 + $0x20] sm:$0xff]
        %v865 = vld [vmem:[#allocation3 + $0x28] sm:$0xff]
        %v866 = vld [vmem:[#allocation3 + $0x30] sm:$0xff]
        %v867 = vld [vmem:[#allocation3 + $0x38] sm:$0xff]
        %v868 = vld [vmem:[#allocation3 + $0x40] sm:$0xff]
        %v869 = vld [vmem:[#allocation3 + $0x48] sm:$0xff]
        %v870 = vld [vmem:[#allocation3 + $0x50] sm:$0xff]
        %v871 = vld [vmem:[#allocation3 + $0x58] sm:$0xff]
        %v872 = vld [vmem:[#allocation3 + $0x60] sm:$0xff]
        %v873 = vld [vmem:[#allocation3 + $0x68] sm:$0xff]
        %v874 = vld [vmem:[#allocation3 + $0x70] sm:$0xff]
        %v875 = vld [vmem:[#allocation3 + $0x78] sm:$0xff]
        %v876 = vmul.f32 %v701, %v860
        %v877 = vmul.f32 %v703, %v861
        %v878 = vmul.f32 %v705, %v862
        %v879 = vmul.f32 %v707, %v863
        %v880 = vmul.f32 %v709, %v864
        %v881 = vmul.f32 %v711, %v865
        %v882 = vmul.f32 %v713, %v866
        %v883 = vmul.f32 %v715, %v867
        %v884 = vmul.f32 %v717, %v868
        %v885 = vmul.f32 %v719, %v869
        %v886 = vmul.f32 %v721, %v870
        %v887 = vmul.f32 %v723, %v871
        %v888 = vmul.f32 %v725, %v872
        %v889 = vmul.f32 %v727, %v873
        %v890 = vmul.f32 %v729, %v874
        %v891 = vmul.f32 %v731, %v875
        %v892 = vunpack.c.l.bf16 %v838
        %v893 = vunpack.c.h.bf16 %v838
        %v894 = vunpack.c.l.bf16 %v841
        %v895 = vunpack.c.h.bf16 %v841
        %v896 = vunpack.c.l.bf16 %v844
        %v897 = vunpack.c.h.bf16 %v844
        %v898 = vunpack.c.l.bf16 %v847
        %v899 = vunpack.c.h.bf16 %v847
        %v900 = vunpack.c.l.bf16 %v850
        %v901 = vunpack.c.h.bf16 %v850
        %v902 = vunpack.c.l.bf16 %v853
        %v903 = vunpack.c.h.bf16 %v853
        %v904 = vunpack.c.l.bf16 %v856
        %v905 = vunpack.c.h.bf16 %v856
        %v906 = vunpack.c.l.bf16 %v859
        %v907 = vunpack.c.h.bf16 %v859
        %908 = vadd.xlane.f32.xlu0 %v892
        %v909 = vpop.xlane.xlu0 %908
        %910 = vadd.xlane.f32.xlu0 %v893
        %v911 = vpop.xlane.xlu0 %910
        %912 = vadd.xlane.f32.xlu0 %v894
        %v913 = vpop.xlane.xlu0 %912
        %914 = vadd.xlane.f32.xlu0 %v895
        %v915 = vpop.xlane.xlu0 %914
        %916 = vadd.xlane.f32.xlu0 %v896
        %v917 = vpop.xlane.xlu0 %916
        %918 = vadd.xlane.f32.xlu0 %v897
        %v919 = vpop.xlane.xlu0 %918
        %920 = vadd.xlane.f32.xlu0 %v898
        %v921 = vpop.xlane.xlu0 %920
        %922 = vadd.xlane.f32.xlu0 %v899
        %v923 = vpop.xlane.xlu0 %922
        %924 = vadd.xlane.f32.xlu0 %v900
        %v925 = vpop.xlane.xlu0 %924
        %926 = vadd.xlane.f32.xlu0 %v901
        %v927 = vpop.xlane.xlu0 %926
        %928 = vadd.xlane.f32.xlu0 %v902
        %v929 = vpop.xlane.xlu0 %928
        %930 = vadd.xlane.f32.xlu0 %v903
        %v931 = vpop.xlane.xlu0 %930
        %932 = vadd.xlane.f32.xlu0 %v904
        %v933 = vpop.xlane.xlu0 %932
        %934 = vadd.xlane.f32.xlu0 %v905
        %v935 = vpop.xlane.xlu0 %934
        %936 = vadd.xlane.f32.xlu0 %v906
        %v937 = vpop.xlane.xlu0 %936
        %938 = vadd.xlane.f32.xlu0 %v907
        %v939 = vpop.xlane.xlu0 %938
        %v940 = vadd.f32 %v876, %v909
        %v941 = vadd.f32 %v877, %v911
        %v942 = vadd.f32 %v878, %v913
        %v943 = vadd.f32 %v879, %v915
        %v944 = vadd.f32 %v880, %v917
        %v945 = vadd.f32 %v881, %v919
        %v946 = vadd.f32 %v882, %v921
        %v947 = vadd.f32 %v883, %v923
        %v948 = vadd.f32 %v884, %v925
        %v949 = vadd.f32 %v885, %v927
        %v950 = vadd.f32 %v886, %v929
        %v951 = vadd.f32 %v887, %v931
        %v952 = vadd.f32 %v888, %v933
        %v953 = vadd.f32 %v889, %v935
        %v954 = vadd.f32 %v890, %v937
        %v955 = vadd.f32 %v891, %v939
        %vm956 = vcmask 7168
        %957 = vst.msk [vmem:[#allocation3] sm:$0xff] %vm956, %v940
        %958 = vst.msk [vmem:[#allocation3 + $0x8] sm:$0xff] %vm956, %v941
        %959 = vst.msk [vmem:[#allocation3 + $0x10] sm:$0xff] %vm956, %v942
        %960 = vst.msk [vmem:[#allocation3 + $0x18] sm:$0xff] %vm956, %v943
        %961 = vst.msk [vmem:[#allocation3 + $0x20] sm:$0xff] %vm956, %v944
        %962 = vst.msk [vmem:[#allocation3 + $0x28] sm:$0xff] %vm956, %v945
        %963 = vst.msk [vmem:[#allocation3 + $0x30] sm:$0xff] %vm956, %v946
        %964 = vst.msk [vmem:[#allocation3 + $0x38] sm:$0xff] %vm956, %v947
        %965 = vst.msk [vmem:[#allocation3 + $0x40] sm:$0xff] %vm956, %v948
        %966 = vst.msk [vmem:[#allocation3 + $0x48] sm:$0xff] %vm956, %v949
        %967 = vst.msk [vmem:[#allocation3 + $0x50] sm:$0xff] %vm956, %v950
        %968 = vst.msk [vmem:[#allocation3 + $0x58] sm:$0xff] %vm956, %v951
        %969 = vst.msk [vmem:[#allocation3 + $0x60] sm:$0xff] %vm956, %v952
        %970 = vst.msk [vmem:[#allocation3 + $0x68] sm:$0xff] %vm956, %v953
        %971 = vst.msk [vmem:[#allocation3 + $0x70] sm:$0xff] %vm956, %v954
        %972 = vst.msk [vmem:[#allocation3 + $0x78] sm:$0xff] %vm956, %v955
        %v973 = vld [vmem:[#allocation4] sm:$0xff]
        %v974 = vld [vmem:[#allocation4 + $0x8] sm:$0xff]
        %v975 = vld [vmem:[#allocation4 + $0x10] sm:$0xff]
        %v976 = vld [vmem:[#allocation4 + $0x18] sm:$0xff]
        %v977 = vld [vmem:[#allocation4 + $0x20] sm:$0xff]
        %v978 = vld [vmem:[#allocation4 + $0x28] sm:$0xff]
        %v979 = vld [vmem:[#allocation4 + $0x30] sm:$0xff]
        %v980 = vld [vmem:[#allocation4 + $0x38] sm:$0xff]
        %v981 = vld [vmem:[#allocation4 + $0x40] sm:$0xff]
        %v982 = vld [vmem:[#allocation4 + $0x48] sm:$0xff]
        %v983 = vld [vmem:[#allocation4 + $0x50] sm:$0xff]
        %v984 = vld [vmem:[#allocation4 + $0x58] sm:$0xff]
        %v985 = vld [vmem:[#allocation4 + $0x60] sm:$0xff]
        %v986 = vld [vmem:[#allocation4 + $0x68] sm:$0xff]
        %v987 = vld [vmem:[#allocation4 + $0x70] sm:$0xff]
        %v988 = vld [vmem:[#allocation4 + $0x78] sm:$0xff]
        %990 = vset.pattern.permute.xlu0 0
        %991 = vperm.xlu0 %990, %v701
        %v992 = vpop.permute.xlu0 %991
        %995 = vset.pattern.permute.xlu0 0
        %996 = vperm.xlu0 %995, %v703
        %v997 = vpop.permute.xlu0 %996
        %1000 = vset.pattern.permute.xlu0 0
        %1001 = vperm.xlu0 %1000, %v705
        %v1002 = vpop.permute.xlu0 %1001
        %1005 = vset.pattern.permute.xlu0 0
        %1006 = vperm.xlu0 %1005, %v707
        %v1007 = vpop.permute.xlu0 %1006
        %1010 = vset.pattern.permute.xlu0 0
        %1011 = vperm.xlu0 %1010, %v709
        %v1012 = vpop.permute.xlu0 %1011
        %1015 = vset.pattern.permute.xlu0 0
        %1016 = vperm.xlu0 %1015, %v711
        %v1017 = vpop.permute.xlu0 %1016
        %1020 = vset.pattern.permute.xlu0 0
        %1021 = vperm.xlu0 %1020, %v713
        %v1022 = vpop.permute.xlu0 %1021
        %1025 = vset.pattern.permute.xlu0 0
        %1026 = vperm.xlu0 %1025, %v715
        %v1027 = vpop.permute.xlu0 %1026
        %1030 = vset.pattern.permute.xlu0 0
        %1031 = vperm.xlu0 %1030, %v717
        %v1032 = vpop.permute.xlu0 %1031
        %1035 = vset.pattern.permute.xlu0 0
        %1036 = vperm.xlu0 %1035, %v719
        %v1037 = vpop.permute.xlu0 %1036
        %1040 = vset.pattern.permute.xlu0 0
        %1041 = vperm.xlu0 %1040, %v721
        %v1042 = vpop.permute.xlu0 %1041
        %1045 = vset.pattern.permute.xlu0 0
        %1046 = vperm.xlu0 %1045, %v723
        %v1047 = vpop.permute.xlu0 %1046
        %1050 = vset.pattern.permute.xlu0 0
        %1051 = vperm.xlu0 %1050, %v725
        %v1052 = vpop.permute.xlu0 %1051
        %1055 = vset.pattern.permute.xlu0 0
        %1056 = vperm.xlu0 %1055, %v727
        %v1057 = vpop.permute.xlu0 %1056
        %1060 = vset.pattern.permute.xlu0 0
        %1061 = vperm.xlu0 %1060, %v729
        %v1062 = vpop.permute.xlu0 %1061
        %1065 = vset.pattern.permute.xlu0 0
        %1066 = vperm.xlu0 %1065, %v731
        %v1067 = vpop.permute.xlu0 %1066
        %v1069 = vmul.f32 %v992, %v973
        %v1070 = vmul.f32 %v997, %v974
        %v1071 = vmul.f32 %v1002, %v975
        %v1072 = vmul.f32 %v1007, %v976
        %v1073 = vmul.f32 %v1012, %v977
        %v1074 = vmul.f32 %v1017, %v978
        %v1075 = vmul.f32 %v1022, %v979
        %v1076 = vmul.f32 %v1027, %v980
        %v1077 = vmul.f32 %v1032, %v981
        %v1078 = vmul.f32 %v1037, %v982
        %v1079 = vmul.f32 %v1042, %v983
        %v1080 = vmul.f32 %v1047, %v984
        %v1081 = vmul.f32 %v1052, %v985
        %v1082 = vmul.f32 %v1057, %v986
        %v1083 = vmul.f32 %v1062, %v987
        %v1084 = vmul.f32 %v1067, %v988
        %v1085 = vld [vmem:[%s278] sm:$0xf]
        %v1086 = vld [vmem:[%s278 + $0x4] sm:$0xf]
        %v1087 = vld [vmem:[%s278 + $0x8] sm:$0xf]
        %v1088 = vld [vmem:[%s278 + $0xc] sm:$0xf]
        %v1089 = vld [vmem:[%s278 + $0x10] sm:$0xf]
        %v1090 = vld [vmem:[%s278 + $0x14] sm:$0xf]
        %v1091 = vld [vmem:[%s278 + $0x18] sm:$0xf]
        %v1092 = vld [vmem:[%s278 + $0x1c] sm:$0xf]
        %v1093 = vld [vmem:[%s278 + $0x20] sm:$0xf]
        %v1094 = vld [vmem:[%s278 + $0x24] sm:$0xf]
        %v1095 = vld [vmem:[%s278 + $0x28] sm:$0xf]
        %v1096 = vld [vmem:[%s278 + $0x2c] sm:$0xf]
        %v1097 = vld [vmem:[%s278 + $0x30] sm:$0xf]
        %v1098 = vld [vmem:[%s278 + $0x34] sm:$0xf]
        %v1099 = vld [vmem:[%s278 + $0x38] sm:$0xf]
        %v1100 = vld [vmem:[%s278 + $0x3c] sm:$0xf]
        %v1117 = vunpack.c.l.b16 %v1085
        %v1118 = vunpack.c.l.b16 %v1086
        %v1119 = vunpack.c.l.b16 %v1087
        %v1120 = vunpack.c.l.b16 %v1088
        %v1121 = vunpack.c.l.b16 %v1089
        %v1122 = vunpack.c.l.b16 %v1090
        %v1123 = vunpack.c.l.b16 %v1091
        %v1124 = vunpack.c.l.b16 %v1092
        %v1125 = vunpack.c.l.b16 %v1093
        %v1126 = vunpack.c.l.b16 %v1094
        %v1127 = vunpack.c.l.b16 %v1095
        %v1128 = vunpack.c.l.b16 %v1096
        %v1129 = vunpack.c.l.b16 %v1097
        %v1130 = vunpack.c.l.b16 %v1098
        %v1131 = vunpack.c.l.b16 %v1099
        %v1132 = vunpack.c.l.b16 %v1100
        %v1133 = vpack.c.b16 %v1118, %v1117
        %v1134 = vpack.c.b16 %v1120, %v1119
        %v1135 = vpack.c.b16 %v1122, %v1121
        %v1136 = vpack.c.b16 %v1124, %v1123
        %v1137 = vpack.c.b16 %v1126, %v1125
        %v1138 = vpack.c.b16 %v1128, %v1127
        %v1139 = vpack.c.b16 %v1130, %v1129
        %v1140 = vpack.c.b16 %v1132, %v1131
        %1149 = vmatprep.subr.bf16.mxu0 0
        %1150 = vmatpush1.bf16.msra.mxu0 %v1133
        %1151 = vmatprep.subr.bf16.mxu0 0
        %1152 = vmatpush1.bf16.msra.mxu0 %v1134
        %1153 = vmatprep.subr.bf16.mxu0 0
        %1154 = vmatpush1.bf16.msra.mxu0 %v1135
        %1155 = vmatprep.subr.bf16.mxu0 0
        %1156 = vmatpush1.bf16.msra.mxu0 %v1136
        %1157 = vmatprep.subr.bf16.mxu0 0
        %1158 = vmatpush1.bf16.msra.mxu0 %v1137
        %1159 = vmatprep.subr.bf16.mxu0 0
        %1160 = vmatpush1.bf16.msra.mxu0 %v1138
        %1161 = vmatprep.subr.bf16.mxu0 0
        %1162 = vmatpush1.bf16.msra.mxu0 %v1139
        %1163 = vmatprep.subr.bf16.mxu0 0
        %1164 = vmatpush1.bf16.msra.mxu0 %v1140
        %1165 = vmatprep.subr.bf16.mxu0 0
        %1166 = vmatpush1.bf16.msra.mxu0 0
        %1167 = vmatprep.subr.bf16.mxu0 0
        %1168 = vmatpush1.bf16.msra.mxu0 0
        %1169 = vmatprep.subr.bf16.mxu0 0
        %1170 = vmatpush1.bf16.msra.mxu0 0
        %1171 = vmatprep.subr.bf16.mxu0 0
        %1172 = vmatpush1.bf16.msra.mxu0 0
        %1173 = vmatprep.subr.bf16.mxu0 0
        %1174 = vmatpush1.bf16.msra.mxu0 0
        %1175 = vmatprep.subr.bf16.mxu0 0
        %1176 = vmatpush1.bf16.msra.mxu0 0
        %1177 = vmatprep.subr.bf16.mxu0 0
        %1178 = vmatpush1.bf16.msra.mxu0 0
        %1179 = vmatprep.subr.bf16.mxu0 0
        %1180 = vmatpush1.bf16.msra.mxu0 0
        %1181 = vmatprep.mubr.bf16.mxu0 0
        %1182 = vmatmul.mubr.bf16.gmra.mrb[0].mxu0 %v838
        %v1183 = vpop.f32.mrb[0].mxu0
        %v1184 = vadd.f32 0.0, %v1183
        %v1185 = vpop.f32.mrb[0].mxu0
        %v1186 = vpop.f32.mrb[0].mxu0
        %v1187 = vadd.f32 0.0, %v1186
        %v1188 = vpop.f32.mrb[0].mxu0
        %1189 = vmatprep.mubr.bf16.mxu0 0
        %1190 = vmatmul.mubr.bf16.gmra.mrb[0].mxu0 %v841
        %v1191 = vpop.f32.mrb[0].mxu0
        %v1192 = vadd.f32 0.0, %v1191
        %v1193 = vpop.f32.mrb[0].mxu0
        %v1194 = vpop.f32.mrb[0].mxu0
        %v1195 = vadd.f32 0.0, %v1194
        %v1196 = vpop.f32.mrb[0].mxu0
        %1197 = vmatprep.mubr.bf16.mxu0 0
        %1198 = vmatmul.mubr.bf16.gmra.mrb[0].mxu0 %v844
        %v1199 = vpop.f32.mrb[0].mxu0
        %v1200 = vadd.f32 0.0, %v1199
        %v1201 = vpop.f32.mrb[0].mxu0
        %v1202 = vpop.f32.mrb[0].mxu0
        %v1203 = vadd.f32 0.0, %v1202
        %v1204 = vpop.f32.mrb[0].mxu0
        %1205 = vmatprep.mubr.bf16.mxu0 0
        %1206 = vmatmul.mubr.bf16.gmra.mrb[0].mxu0 %v847
        %v1207 = vpop.f32.mrb[0].mxu0
        %v1208 = vadd.f32 0.0, %v1207
        %v1209 = vpop.f32.mrb[0].mxu0
        %v1210 = vpop.f32.mrb[0].mxu0
        %v1211 = vadd.f32 0.0, %v1210
        %v1212 = vpop.f32.mrb[0].mxu0
        %1213 = vmatprep.mubr.bf16.mxu0 0
        %1214 = vmatmul.mubr.bf16.gmra.mrb[0].mxu0 %v850
        %v1215 = vpop.f32.mrb[0].mxu0
        %v1216 = vadd.f32 0.0, %v1215
        %v1217 = vpop.f32.mrb[0].mxu0
        %v1218 = vpop.f32.mrb[0].mxu0
        %v1219 = vadd.f32 0.0, %v1218
        %v1220 = vpop.f32.mrb[0].mxu0
        %1221 = vmatprep.mubr.bf16.mxu0 0
        %1222 = vmatmul.mubr.bf16.gmra.mrb[0].mxu0 %v853
        %v1223 = vpop.f32.mrb[0].mxu0
        %v1224 = vadd.f32 0.0, %v1223
        %v1225 = vpop.f32.mrb[0].mxu0
        %v1226 = vpop.f32.mrb[0].mxu0
        %v1227 = vadd.f32 0.0, %v1226
        %v1228 = vpop.f32.mrb[0].mxu0
        %1229 = vmatprep.mubr.bf16.mxu0 0
        %1230 = vmatmul.mubr.bf16.gmra.mrb[0].mxu0 %v856
        %v1231 = vpop.f32.mrb[0].mxu0
        %v1232 = vadd.f32 0.0, %v1231
        %v1233 = vpop.f32.mrb[0].mxu0
        %v1234 = vpop.f32.mrb[0].mxu0
        %v1235 = vadd.f32 0.0, %v1234
        %v1236 = vpop.f32.mrb[0].mxu0
        %1237 = vmatprep.mubr.bf16.mxu0 0
        %1238 = vmatmul.mubr.bf16.gmra.mrb[0].mxu0 %v859
        %v1239 = vpop.f32.mrb[0].mxu0
        %v1240 = vadd.f32 0.0, %v1239
        %v1241 = vpop.f32.mrb[0].mxu0
        %v1242 = vpop.f32.mrb[0].mxu0
        %v1243 = vadd.f32 0.0, %v1242
        %v1244 = vpop.f32.mrb[0].mxu0
        %1245 = vdwg.mxu0
        %v1246 = vadd.f32 %v1069, %v1184
        %v1247 = vadd.f32 %v1070, %v1187
        %v1248 = vadd.f32 %v1071, %v1192
        %v1249 = vadd.f32 %v1072, %v1195
        %v1250 = vadd.f32 %v1073, %v1200
        %v1251 = vadd.f32 %v1074, %v1203
        %v1252 = vadd.f32 %v1075, %v1208
        %v1253 = vadd.f32 %v1076, %v1211
        %v1254 = vadd.f32 %v1077, %v1216
        %v1255 = vadd.f32 %v1078, %v1219
        %v1256 = vadd.f32 %v1079, %v1224
        %v1257 = vadd.f32 %v1080, %v1227
        %v1258 = vadd.f32 %v1081, %v1232
        %v1259 = vadd.f32 %v1082, %v1235
        %v1260 = vadd.f32 %v1083, %v1240
        %v1261 = vadd.f32 %v1084, %v1243
        %1262 = vst [vmem:[#allocation4] sm:$0xff] %v1246
        %1263 = vst [vmem:[#allocation4 + $0x8] sm:$0xff] %v1247
        %1264 = vst [vmem:[#allocation4 + $0x10] sm:$0xff] %v1248
        %1265 = vst [vmem:[#allocation4 + $0x18] sm:$0xff] %v1249
        %1266 = vst [vmem:[#allocation4 + $0x20] sm:$0xff] %v1250
        %1267 = vst [vmem:[#allocation4 + $0x28] sm:$0xff] %v1251
        %1268 = vst [vmem:[#allocation4 + $0x30] sm:$0xff] %v1252
        %1269 = vst [vmem:[#allocation4 + $0x38] sm:$0xff] %v1253
        %1270 = vst [vmem:[#allocation4 + $0x40] sm:$0xff] %v1254
        %1271 = vst [vmem:[#allocation4 + $0x48] sm:$0xff] %v1255
        %1272 = vst [vmem:[#allocation4 + $0x50] sm:$0xff] %v1256
        %1273 = vst [vmem:[#allocation4 + $0x58] sm:$0xff] %v1257
        %1274 = vst [vmem:[#allocation4 + $0x60] sm:$0xff] %v1258
        %1275 = vst [vmem:[#allocation4 + $0x68] sm:$0xff] %v1259
        %1276 = vst [vmem:[#allocation4 + $0x70] sm:$0xff] %v1260
        %1277 = vst [vmem:[#allocation4 + $0x78] sm:$0xff] %v1261
        %1278 = vst.msk [vmem:[#allocation2] sm:$0xff] %vm956, %v668
        %1279 = vst.msk [vmem:[#allocation2 + $0x8] sm:$0xff] %vm956, %v669
        %1280 = vst.msk [vmem:[#allocation2 + $0x10] sm:$0xff] %vm956, %v670
        %1281 = vst.msk [vmem:[#allocation2 + $0x18] sm:$0xff] %vm956, %v671
        %1282 = vst.msk [vmem:[#allocation2 + $0x20] sm:$0xff] %vm956, %v672
        %1283 = vst.msk [vmem:[#allocation2 + $0x28] sm:$0xff] %vm956, %v673
        %1284 = vst.msk [vmem:[#allocation2 + $0x30] sm:$0xff] %vm956, %v674
        %1285 = vst.msk [vmem:[#allocation2 + $0x38] sm:$0xff] %vm956, %v675
        %1286 = vst.msk [vmem:[#allocation2 + $0x40] sm:$0xff] %vm956, %v676
        %1287 = vst.msk [vmem:[#allocation2 + $0x48] sm:$0xff] %vm956, %v677
        %1288 = vst.msk [vmem:[#allocation2 + $0x50] sm:$0xff] %vm956, %v678
        %1289 = vst.msk [vmem:[#allocation2 + $0x58] sm:$0xff] %vm956, %v679
        %1290 = vst.msk [vmem:[#allocation2 + $0x60] sm:$0xff] %vm956, %v680
        %1291 = vst.msk [vmem:[#allocation2 + $0x68] sm:$0xff] %vm956, %v681
        %1292 = vst.msk [vmem:[#allocation2 + $0x70] sm:$0xff] %vm956, %v682
        %1293 = vst.msk [vmem:[#allocation2 + $0x78] sm:$0xff] %vm956, %v683
        %p1294 = scmp.eq.s32.totalorder %s27, 4
        // Predicated region
        $region53: #{fnn_forward.1} parent=39 // pred_check
          %p1295 = pneg %p1294
        $region54: #{fnn_forward.1} parent=39 // pred_check_branch
          %1297 = sbr.rel (%p1295) target = $region56
        $region55: #{fnn_forward.1} parent=39 // pred_region
          %v1298 = vld [vmem:[#allocation4] sm:$0xff]
          %v1299 = vld [vmem:[#allocation4 + $0x8] sm:$0xff]
          %v1300 = vld [vmem:[#allocation4 + $0x10] sm:$0xff]
          %v1301 = vld [vmem:[#allocation4 + $0x18] sm:$0xff]
          %v1302 = vld [vmem:[#allocation4 + $0x20] sm:$0xff]
          %v1303 = vld [vmem:[#allocation4 + $0x28] sm:$0xff]
          %v1304 = vld [vmem:[#allocation4 + $0x30] sm:$0xff]
          %v1305 = vld [vmem:[#allocation4 + $0x38] sm:$0xff]
          %v1306 = vld [vmem:[#allocation4 + $0x40] sm:$0xff]
          %v1307 = vld [vmem:[#allocation4 + $0x48] sm:$0xff]
          %v1308 = vld [vmem:[#allocation4 + $0x50] sm:$0xff]
          %v1309 = vld [vmem:[#allocation4 + $0x58] sm:$0xff]
          %v1310 = vld [vmem:[#allocation4 + $0x60] sm:$0xff]
          %v1311 = vld [vmem:[#allocation4 + $0x68] sm:$0xff]
          %v1312 = vld [vmem:[#allocation4 + $0x70] sm:$0xff]
          %v1313 = vld [vmem:[#allocation4 + $0x78] sm:$0xff]
          %v1314 = vld [vmem:[#allocation3] sm:$0xff]
          %v1315 = vld [vmem:[#allocation3 + $0x8] sm:$0xff]
          %v1316 = vld [vmem:[#allocation3 + $0x10] sm:$0xff]
          %v1317 = vld [vmem:[#allocation3 + $0x18] sm:$0xff]
          %v1318 = vld [vmem:[#allocation3 + $0x20] sm:$0xff]
          %v1319 = vld [vmem:[#allocation3 + $0x28] sm:$0xff]
          %v1320 = vld [vmem:[#allocation3 + $0x30] sm:$0xff]
          %v1321 = vld [vmem:[#allocation3 + $0x38] sm:$0xff]
          %v1322 = vld [vmem:[#allocation3 + $0x40] sm:$0xff]
          %v1323 = vld [vmem:[#allocation3 + $0x48] sm:$0xff]
          %v1324 = vld [vmem:[#allocation3 + $0x50] sm:$0xff]
          %v1325 = vld [vmem:[#allocation3 + $0x58] sm:$0xff]
          %v1326 = vld [vmem:[#allocation3 + $0x60] sm:$0xff]
          %v1327 = vld [vmem:[#allocation3 + $0x68] sm:$0xff]
          %v1328 = vld [vmem:[#allocation3 + $0x70] sm:$0xff]
          %v1329 = vld [vmem:[#allocation3 + $0x78] sm:$0xff]
          %1331 = vset.pattern.permute.xlu0 0
          %1332 = vperm.xlu0 %1331, %v1314
          %v1333 = vpop.permute.xlu0 %1332
          %1336 = vset.pattern.permute.xlu0 0
          %1337 = vperm.xlu0 %1336, %v1315
          %v1338 = vpop.permute.xlu0 %1337
          %1341 = vset.pattern.permute.xlu0 0
          %1342 = vperm.xlu0 %1341, %v1316
          %v1343 = vpop.permute.xlu0 %1342
          %1346 = vset.pattern.permute.xlu0 0
          %1347 = vperm.xlu0 %1346, %v1317
          %v1348 = vpop.permute.xlu0 %1347
          %1351 = vset.pattern.permute.xlu0 0
          %1352 = vperm.xlu0 %1351, %v1318
          %v1353 = vpop.permute.xlu0 %1352
          %1356 = vset.pattern.permute.xlu0 0
          %1357 = vperm.xlu0 %1356, %v1319
          %v1358 = vpop.permute.xlu0 %1357
          %1361 = vset.pattern.permute.xlu0 0
          %1362 = vperm.xlu0 %1361, %v1320
          %v1363 = vpop.permute.xlu0 %1362
          %1366 = vset.pattern.permute.xlu0 0
          %1367 = vperm.xlu0 %1366, %v1321
          %v1368 = vpop.permute.xlu0 %1367
          %1371 = vset.pattern.permute.xlu0 0
          %1372 = vperm.xlu0 %1371, %v1322
          %v1373 = vpop.permute.xlu0 %1372
          %1376 = vset.pattern.permute.xlu0 0
          %1377 = vperm.xlu0 %1376, %v1323
          %v1378 = vpop.permute.xlu0 %1377
          %1381 = vset.pattern.permute.xlu0 0
          %1382 = vperm.xlu0 %1381, %v1324
          %v1383 = vpop.permute.xlu0 %1382
          %1386 = vset.pattern.permute.xlu0 0
          %1387 = vperm.xlu0 %1386, %v1325
          %v1388 = vpop.permute.xlu0 %1387
          %1391 = vset.pattern.permute.xlu0 0
          %1392 = vperm.xlu0 %1391, %v1326
          %v1393 = vpop.permute.xlu0 %1392
          %1396 = vset.pattern.permute.xlu0 0
          %1397 = vperm.xlu0 %1396, %v1327
          %v1398 = vpop.permute.xlu0 %1397
          %1401 = vset.pattern.permute.xlu0 0
          %1402 = vperm.xlu0 %1401, %v1328
          %v1403 = vpop.permute.xlu0 %1402
          %1406 = vset.pattern.permute.xlu0 0
          %1407 = vperm.xlu0 %1406, %v1329
          %v1408 = vpop.permute.xlu0 %1407
          %v1410 = vrcp.pop %v1333
          %v1411 = vmul.f32 %v1298, %v1410
          %v1412 = vrcp.pop %v1338
          %v1413 = vmul.f32 %v1299, %v1412
          %v1414 = vrcp.pop %v1343
          %v1415 = vmul.f32 %v1300, %v1414
          %v1416 = vrcp.pop %v1348
          %v1417 = vmul.f32 %v1301, %v1416
          %v1418 = vrcp.pop %v1353
          %v1419 = vmul.f32 %v1302, %v1418
          %v1420 = vrcp.pop %v1358
          %v1421 = vmul.f32 %v1303, %v1420
          %v1422 = vrcp.pop %v1363
          %v1423 = vmul.f32 %v1304, %v1422
          %v1424 = vrcp.pop %v1368
          %v1425 = vmul.f32 %v1305, %v1424
          %v1426 = vrcp.pop %v1373
          %v1427 = vmul.f32 %v1306, %v1426
          %v1428 = vrcp.pop %v1378
          %v1429 = vmul.f32 %v1307, %v1428
          %v1430 = vrcp.pop %v1383
          %v1431 = vmul.f32 %v1308, %v1430
          %v1432 = vrcp.pop %v1388
          %v1433 = vmul.f32 %v1309, %v1432
          %v1434 = vrcp.pop %v1393
          %v1435 = vmul.f32 %v1310, %v1434
          %v1436 = vrcp.pop %v1398
          %v1437 = vmul.f32 %v1311, %v1436
          %v1438 = vrcp.pop %v1403
          %v1439 = vmul.f32 %v1312, %v1438
          %v1440 = vrcp.pop %v1408
          %v1441 = vmul.f32 %v1313, %v1440
          %v1442 = vld [vmem:[%s4] sm:$0x1]
          %v1444 = vlaneseq
          %v1445 = vshrl.u32 %v1444, 7
          %v1446 = vsub.s32 0, %v1445
          %v1447 = vrot.slane %v1442, %v1446
          %v1449 = vadd.f32 %v1411, %v1447
          %v1450 = vadd.f32 %v1413, %v1447
          %v1451 = vadd.f32 %v1415, %v1447
          %v1452 = vadd.f32 %v1417, %v1447
          %v1453 = vadd.f32 %v1419, %v1447
          %v1454 = vadd.f32 %v1421, %v1447
          %v1455 = vadd.f32 %v1423, %v1447
          %v1456 = vadd.f32 %v1425, %v1447
          %v1457 = vadd.f32 %v1427, %v1447
          %v1458 = vadd.f32 %v1429, %v1447
          %v1459 = vadd.f32 %v1431, %v1447
          %v1460 = vadd.f32 %v1433, %v1447
          %v1461 = vadd.f32 %v1435, %v1447
          %v1462 = vadd.f32 %v1437, %v1447
          %v1463 = vadd.f32 %v1439, %v1447
          %v1464 = vadd.f32 %v1441, %v1447
          %1465 = vst [vmem:[%s332] sm:$0xff] %v1449
          %1466 = vst [vmem:[%s332 + $0x8] sm:$0xff] %v1450
          %1467 = vst [vmem:[%s332 + $0x10] sm:$0xff] %v1451
          %1468 = vst [vmem:[%s332 + $0x18] sm:$0xff] %v1452
          %1469 = vst [vmem:[%s332 + $0x20] sm:$0xff] %v1453
          %1470 = vst [vmem:[%s332 + $0x28] sm:$0xff] %v1454
          %1471 = vst [vmem:[%s332 + $0x30] sm:$0xff] %v1455
          %1472 = vst [vmem:[%s332 + $0x38] sm:$0xff] %v1456
          %1473 = vst [vmem:[%s332 + $0x40] sm:$0xff] %v1457
          %1474 = vst [vmem:[%s332 + $0x48] sm:$0xff] %v1458
          %1475 = vst [vmem:[%s332 + $0x50] sm:$0xff] %v1459
          %1476 = vst [vmem:[%s332 + $0x58] sm:$0xff] %v1460
          %1477 = vst [vmem:[%s332 + $0x60] sm:$0xff] %v1461
          %1478 = vst [vmem:[%s332 + $0x68] sm:$0xff] %v1462
          %1479 = vst [vmem:[%s332 + $0x70] sm:$0xff] %v1463
          %1480 = vst [vmem:[%s332 + $0x78] sm:$0xff] %v1464
        $region56: #{fnn_forward.1} parent=39 // pred_fallthru
          _
        %s1481 = smul.u32 16, %s26
        %p1482 = scmp.lt.s32.totalorder %s1481, 15
        %s1483 = scalar_select %p1482, %s1481, 15
        %s1484 = smul.addr %s1483, 8
        %s1485 = scalar_lea.vmem %s5, %s1484
        // Predicated region
        $region57: #{fnn_forward.1} parent=39 // pred_check
          %p1486 = pneg %p177
        $region58: #{fnn_forward.1} parent=39 // pred_check_branch
          %1488 = sbr.rel (%p1486) target = $region60
        $region59: #{fnn_forward.1} parent=39 // pred_region
          %s1489 = smul.u32 16, %s26
        $region60: #{fnn_forward.1} parent=39 // pred_fallthru
          _
        // Predicated region
        $region61: #{fnn_forward.1} parent=39 // pred_check
          %p1490 = pneg %p177
        $region62: #{fnn_forward.1} parent=39 // pred_check_branch
          %1492 = sbr.rel (%p1490) target = $region64
        $region63: #{fnn_forward.1} parent=39 // pred_region
          %s1493 = smul.u32 16, %s26
          %p1494 = scmp.lt.s32.totalorder %s1493, 15
          %s1495 = scalar_select %p1494, %s1493, 15
          %s1496 = smul.addr %s1495, 8
          %s1497 = scalar_lea.vmem %s5, %s1496
        $region64: #{fnn_forward.1} parent=39 // pred_fallthru
          _
      $region40: #{fnn_forward.1} parent=5 // pred_fallthru
        _
      %p1498 = scmp.le.s32.totalorder 2, %s17
      // Predicated region
      $region65: #{fnn_forward.1} parent=5 // pred_check
        %p1499 = pneg %p1498
      $region66: #{fnn_forward.1} parent=5 // pred_check_branch
        %1501 = sbr.rel (%p1499) target = $region68
      $region67: #{fnn_forward.1} parent=5 // pred_region
        %s1502 = ssub.s32 %s17, 2
      $region68: #{fnn_forward.1} parent=5 // pred_fallthru
        _
    $region6: #{fnn_forward.1} parent=1 // loop_footer
      %s21 = sadd.s32 1, %s17
    $region7: #{fnn_forward.1} parent=1 // loop_footer_branch
      %16 = sbr.rel target = $region3
    $region8: #{fnn_forward.1} parent=1 // loop_exit
      _
    %1503 = vsyncpa [#allocation6], 1
    %s1504 = scalar_lea.sflag [#allocation6], 1
    %1505 = vsyncpa %s1504, 1
    %1506 = vsyncpa [#allocation8], 1
    %s1507 = scalar_lea.sflag [#allocation8], 1
    %1508 = vsyncpa %s1507, 1

</llo_original>
